<compile_context>
chip_gen: v6e
topology: v6e:2x2x1
jax: 0.10.0
libtpu: 0.0.40
codegen_flags: <defaults>
</compile_context>

<pallas_src>
import jax
import jax.numpy as jnp
from jax.experimental import pallas as pl
from jax.experimental.pallas import tpu as pltpu

# ----------------------------- model sizes ---------------------------------
SRC_LEN = 8
TRG_LEN = 8
BATCH = 2
SRC_VOCAB = 12
TRG_VOCAB = 10
EMB = 16
HID = 32          # encoder.hid_dim == decoder.dec_hid_dim

B_PAD = 8         # pad batch to a full sublane tile
V_PAD = 128       # pad logits to a full lane tile (unmasked stores)
NEG = -1e9        # bias for padded vocab lanes (never wins argmax, sliced away)


# ----------------------------- Pallas kernels -------------------------------
def _encoder_kernel(x_ref, w_ref, b_ref, enc_ref, hfin_ref, h_sc, c_sc):
    """Fused LSTM encoder: one grid step per source position; h/c in VMEM scratch."""
    t = pl.program_id(0)

    @pl.when(t == 0)
    def _init():
        h_sc[...] = jnp.zeros_like(h_sc)
        c_sc[...] = jnp.zeros_like(c_sc)

    x = x_ref[0]                       # [B_PAD, EMB]
    h = h_sc[...]                      # [B_PAD, HID]
    c = c_sc[...]
    H = h.shape[-1]

    # single concatenated matmul: [x ; h] @ [Wih ; Whh]  -> [B_PAD, 4H]
    xh = jnp.concatenate([x, h], axis=-1)
    gates = jnp.dot(xh, w_ref[...], preferred_element_type=jnp.float32) + b_ref[...]

    i = jax.nn.sigmoid(gates[:, 0 * H:1 * H])
    f = jax.nn.sigmoid(gates[:, 1 * H:2 * H])
    g = jnp.tanh(gates[:, 2 * H:3 * H])
    o = jax.nn.sigmoid(gates[:, 3 * H:4 * H])
    c_new = f * c + i * g
    h_new = o * jnp.tanh(c_new)

    h_sc[...] = h_new
    c_sc[...] = c_new
    enc_ref[0] = h_new                 # time-indexed output block
    hfin_ref[...] = h_new              # resident output; last step wins


def _decoder_kernel(tf_ref, temb_ref, h0_ref, enc_ref, encp_ref, etab_ref,
                    wah_ref, v_ref, wgi_ref, wgh_ref, bgi_ref, bgh_ref,
                    wout_ref, bout_ref, out_ref, h_sc, inp_sc):
    """Fused decoder: attention + GRU + projection + on-device next-token select."""
    g = pl.program_id(0)               # decode step t = g + 1

    @pl.when(g == 0)
    def _init():
        h_sc[...] = h0_ref[...]        # encoder final hidden
        inp_sc[...] = temb_ref[0]      # embedding of trg[0]

    emb = inp_sc[...]                  # [B_PAD, EMB]
    h = h_sc[...]                      # [B_PAD, HID]
    enc = enc_ref[...]                 # [B_PAD, S, HID]
    H = h.shape[-1]

    # ---- Bahdanau attention (enc @ W_e + b hoisted out of the loop -> encp_ref) ----
    proj_h = jnp.dot(h, wah_ref[...], preferred_element_type=jnp.float32)      # [B, H]
    energy = jnp.tanh(encp_ref[...] + proj_h[:, None, :])                      # [B, S, H]
    scores = jnp.sum(energy * v_ref[...], axis=-1)                             # lane reduce
    scores = scores - jnp.max(scores, axis=-1, keepdims=True)
    e = jnp.exp(scores)
    attn = e / jnp.sum(e, axis=-1, keepdims=True)                              # [B, S]
    context = jnp.einsum('bks,bsh->bkh', attn[:, None, :], enc,
                         preferred_element_type=jnp.float32)[:, 0, :]          # [B, H]

    # ---- GRU cell; gi = [emb ; context] @ [Wih_e ; Wih_c] ----
    xc = jnp.concatenate([emb, context], axis=-1)
    gi = jnp.dot(xc, wgi_ref[...], preferred_element_type=jnp.float32) + bgi_ref[...]
    gh = jnp.dot(h, wgh_ref[...], preferred_element_type=jnp.float32) + bgh_ref[...]
    r = jax.nn.sigmoid(gi[:, 0:H] + gh[:, 0:H])
    z = jax.nn.sigmoid(gi[:, H:2 * H] + gh[:, H:2 * H])
    n = jnp.tanh(gi[:, 2 * H:3 * H] + r * gh[:, 2 * H:3 * H])
    h_new = (1.0 - z) * n + z * h

    # ---- output projection: [h_new ; context ; emb] @ Wout_cat (vocab padded to 128) ----
    hce = jnp.concatenate([h_new, context, emb], axis=-1)
    logits = jnp.dot(hce, wout_ref[...], preferred_element_type=jnp.float32) + bout_ref[...]

    out_ref[0] = logits                # lane-dense [B_PAD, 128] store
    h_sc[...] = h_new

    # ---- next decoder input: teacher forcing vs greedy argmax, all on-device ----
    lane = jax.lax.broadcasted_iota(jnp.int32, logits.shape, 1)
    mx = jnp.max(logits, axis=-1, keepdims=True)
    idx = jnp.min(jnp.where(logits == mx, lane, logits.shape[-1]),
                  axis=-1, keepdims=True)                                      # first argmax
    pred_oh = (lane == idx).astype(jnp.float32)                                # [B, V_PAD]
    pred_emb = jnp.dot(pred_oh, etab_ref[...], preferred_element_type=jnp.float32)
    tfb = tf_ref[g + 1]                                                        # [B_PAD, 1]
    inp_sc[...] = tfb * temb_ref[g + 1] + (1.0 - tfb) * pred_emb


# ----------------------------- kernel wrappers -------------------------------
def run_encoder(src_emb, enc_w, enc_b):
    return pl.pallas_call(
        _encoder_kernel,
        grid=(SRC_LEN,),
        in_specs=[
            pl.BlockSpec((1, B_PAD, EMB), lambda t: (t, 0, 0)),
            pl.BlockSpec((EMB + HID, 4 * HID), lambda t: (0, 0)),
            pl.BlockSpec((1, 4 * HID), lambda t: (0, 0)),
        ],
        out_specs=(
            pl.BlockSpec((1, B_PAD, HID), lambda t: (t, 0, 0)),
            pl.BlockSpec((B_PAD, HID), lambda t: (0, 0)),
        ),
        out_shape=(
            jax.ShapeDtypeStruct((SRC_LEN, B_PAD, HID), jnp.float32),
            jax.ShapeDtypeStruct((B_PAD, HID), jnp.float32),
        ),
        scratch_shapes=[pltpu.VMEM((B_PAD, HID), jnp.float32),
                        pltpu.VMEM((B_PAD, HID), jnp.float32)],
        compiler_params=pltpu.CompilerParams(dimension_semantics=("arbitrary",)),
    )(src_emb, enc_w, enc_b)


def run_decoder(tf_blend, trg_emb, h0, enc_bsh, enc_proj, p):
    c2 = lambda g: (0, 0)
    c3 = lambda g: (0, 0, 0)
    in_specs = [
        pl.BlockSpec((TRG_LEN, B_PAD, 1), c3),
        pl.BlockSpec((TRG_LEN, B_PAD, EMB), c3),
        pl.BlockSpec((B_PAD, HID), c2),
        pl.BlockSpec((B_PAD, SRC_LEN, HID), c3),
        pl.BlockSpec((B_PAD, SRC_LEN, HID), c3),
        pl.BlockSpec((V_PAD, EMB), c2),
        pl.BlockSpec((HID, HID), c2),
        pl.BlockSpec((1, HID), c2),
        pl.BlockSpec((EMB + HID, 3 * HID), c2),
        pl.BlockSpec((HID, 3 * HID), c2),
        pl.BlockSpec((1, 3 * HID), c2),
        pl.BlockSpec((1, 3 * HID), c2),
        pl.BlockSpec((2 * HID + EMB, V_PAD), c2),
        pl.BlockSpec((1, V_PAD), c2),
    ]
    return pl.pallas_call(
        _decoder_kernel,
        grid=(TRG_LEN - 1,),
        in_specs=in_specs,
        out_specs=pl.BlockSpec((1, B_PAD, V_PAD), lambda g: (g, 0, 0)),
        out_shape=jax.ShapeDtypeStruct((TRG_LEN - 1, B_PAD, V_PAD), jnp.float32),
        scratch_shapes=[pltpu.VMEM((B_PAD, HID), jnp.float32),
                        pltpu.VMEM((B_PAD, EMB), jnp.float32)],
        compiler_params=pltpu.CompilerParams(dimension_semantics=("arbitrary",)),
    )(tf_blend, trg_emb, h0, enc_bsh, enc_proj,
      p['emb_trg_pad'], p['attn_wh'], p['attn_v'],
      p['gru_wgi'], p['gru_whh'], p['gru_bih'], p['gru_bhh'],
      p['out_w'], p['out_b'])


# ----------------------------- params (pre-concatenated / padded) ------------
def init_params(key):
    ks = jax.random.split(key, 18)
    s = float(1.0 / (HID ** 0.5))
    u = lambda k, shp, sc: jax.random.uniform(k, shp, jnp.float32, -sc, sc)

    emb_src = u(ks[0], (SRC_VOCAB, EMB), 0.1)
    emb_trg = u(ks[1], (TRG_VOCAB, EMB), 0.1)
    enc_wih = u(ks[2], (EMB, 4 * HID), s)
    enc_whh = u(ks[3], (HID, 4 * HID), s)
    enc_b = u(ks[4], (1, 4 * HID), s)
    attn_wh = u(ks[5], (HID, HID), s)
    attn_we = u(ks[6], (HID, HID), s)
    attn_b = u(ks[7], (1, HID), s)
    attn_v = u(ks[8], (1, HID), s)
    gru_wih_e = u(ks[9], (EMB, 3 * HID), s)
    gru_wih_c = u(ks[10], (HID, 3 * HID), s)
    gru_whh = u(ks[11], (HID, 3 * HID), s)
    gru_bih = u(ks[12], (1, 3 * HID), s)
    gru_bhh = u(ks[13], (1, 3 * HID), s)
    out_wh = u(ks[14], (HID, TRG_VOCAB), s)
    out_wc = u(ks[15], (HID, TRG_VOCAB), s)
    out_we = u(ks[16], (EMB, TRG_VOCAB), s)
    out_b = u(ks[17], (1, TRG_VOCAB), s)

    out_w = jnp.concatenate([out_wh, out_wc, out_we], axis=0)      # [2H+EMB, V]
    return dict(
        emb_src=emb_src,
        emb_trg=emb_trg,
        emb_trg_pad=jnp.pad(emb_trg, ((0, V_PAD - TRG_VOCAB), (0, 0))),
        enc_w=jnp.concatenate([enc_wih, enc_whh], axis=0),          # [EMB+H, 4H]
        enc_b=enc_b,
        attn_wh=attn_wh, attn_we=attn_we, attn_b=attn_b, attn_v=attn_v,
        gru_wgi=jnp.concatenate([gru_wih_e, gru_wih_c], axis=0),    # [EMB+H, 3H]
        gru_whh=gru_whh, gru_bih=gru_bih, gru_bhh=gru_bhh,
        out_w=jnp.pad(out_w, ((0, 0), (0, V_PAD - TRG_VOCAB))),
        out_b=jnp.pad(out_b, ((0, 0), (0, V_PAD - TRG_VOCAB)), constant_values=NEG),
    )


# ----------------------------- forward (glue) ---------------------------------
def _forward(p, src, trg, tf_key, teacher_forcing_ratio):
    """Mirrors Seq2Seq.forward: outputs[0] stays zero, steps 1..T-1 decoded."""
    B = src.shape[1]
    pad_b = B_PAD - B
    # one-time embedding gathers (loop-invariant glue, not per-step)
    src_emb = jnp.pad(jnp.take(p['emb_src'], src, axis=0), ((0, 0), (0, pad_b), (0, 0)))
    trg_emb = jnp.pad(jnp.take(p['emb_trg'], trg, axis=0), ((0, 0), (0, pad_b), (0, 0)))

    enc_tbh, h_fin = run_encoder(src_emb, p['enc_w'], p['enc_b'])
    enc_bsh = jnp.transpose(enc_tbh, (1, 0, 2))                      # [B_PAD, S, HID]
    # hoisted, loop-invariant attention projection (+ bias folded in)
    enc_proj = jnp.einsum('bsh,hk->bsk', enc_bsh, p['attn_we']) + p['attn_b'][None, :, :]

    # per-call teacher-forcing coin flips, on-device (PyTorch uses random.random())
    tf = (jax.random.uniform(tf_key, (TRG_LEN,)) < teacher_forcing_ratio).astype(jnp.float32)
    tf_blend = jnp.tile(tf[:, None, None], (1, B_PAD, 1))            # [T, B_PAD, 1]

    dec = run_decoder(tf_blend, trg_emb, h_fin, enc_bsh, enc_proj, p)
    logits = dec[:, :B, :TRG_VOCAB]                                  # strip pads
    return jnp.concatenate([jnp.zeros((1, B, TRG_VOCAB), jnp.float32), logits], axis=0)


seq2seq_forward = jax.jit(_forward)


# ----------------------------- demo ------------------------------------------
if __name__ == "__main__":
    key = jax.random.PRNGKey(0)
    kp, ksrc, ktrg, ktf = jax.random.split(key, 4)
    params = init_params(kp)
    src = jax.random.randint(ksrc, (SRC_LEN, BATCH), 0, SRC_VOCAB, dtype=jnp.int32)
    trg = jax.random.randint(ktrg, (TRG_LEN, BATCH), 0, TRG_VOCAB, dtype=jnp.int32)

    out = seq2seq_forward(params, src, trg, ktf, 0.5)
    out = jax.block_until_ready(out)
    assert out.shape == (TRG_LEN, BATCH, TRG_VOCAB)
    assert bool(jnp.all(jnp.isfinite(out)))
    print("KERNEL_OK")
</pallas_src>

<mosaic_0001>
module attributes {stable_mosaic.version = 11 : i64} {
  func.func @_encoder_kernel(%arg0: i32, %arg1: memref<1x8x16xf32, #tpu.memory_space<vmem>>, %arg2: memref<48x128xf32, #tpu.memory_space<vmem>>, %arg3: memref<1x128xf32, #tpu.memory_space<vmem>>, %arg4: memref<1x8x32xf32, #tpu.memory_space<vmem>>, %arg5: memref<8x32xf32, #tpu.memory_space<vmem>>, %arg6: memref<8x32xf32, #tpu.memory_space<vmem>>, %arg7: memref<8x32xf32, #tpu.memory_space<vmem>>) attributes {dimension_semantics = [#tpu.dimension_semantics<arbitrary>], iteration_bounds = array<i64: 8>, scalar_prefetch = 0 : i64, scratch_operands = 2 : i64, tpu.core_type = #tpu.core_type<tc>, window_params = [{transform_indices = @transform_0, window_bounds = array<i64: 1, 8, 16>}, {pipeline_mode = #tpu.pipeline_mode<synchronous>, transform_indices = @transform_1, window_bounds = array<i64: 48, 128>}, {pipeline_mode = #tpu.pipeline_mode<synchronous>, transform_indices = @transform_2, window_bounds = array<i64: 1, 128>}, {transform_indices = @transform_3, window_bounds = array<i64: 1, 8, 32>}, {pipeline_mode = #tpu.pipeline_mode<synchronous>, transform_indices = @transform_4, window_bounds = array<i64: 8, 32>}]} {
    %c0_i32 = arith.constant 0 : i32
    %0 = arith.cmpi eq, %arg0, %c0_i32 : i32
    %1 = arith.extui %0 : i1 to i32
    %c0_i32_0 = arith.constant 0 : i32
    %2 = arith.cmpi ne, %1, %c0_i32_0 : i32
    scf.if %2 {
      %cst_23 = arith.constant 0.000000e+00 : f32
      %44 = vector.broadcast %cst_23 : f32 to vector<8x32xf32>
      %c0_24 = arith.constant 0 : index
      %c0_25 = arith.constant 0 : index
      %45 = vector.load %arg6[%c0_24, %c0_25] : memref<8x32xf32, #tpu.memory_space<vmem>>, vector<8x32xf32>
      tpu.vector_store %arg6[%c0_24, %c0_25], %44 {strides = array<i32>} : memref<8x32xf32, #tpu.memory_space<vmem>>, vector<8x32xf32>,
      %cst_26 = arith.constant 0.000000e+00 : f32
      %46 = vector.broadcast %cst_26 : f32 to vector<8x32xf32>
      %c0_27 = arith.constant 0 : index
      %c0_28 = arith.constant 0 : index
      %47 = vector.load %arg7[%c0_27, %c0_28] : memref<8x32xf32, #tpu.memory_space<vmem>>, vector<8x32xf32>
      tpu.vector_store %arg7[%c0_27, %c0_28], %46 {strides = array<i32>} : memref<8x32xf32, #tpu.memory_space<vmem>>, vector<8x32xf32>,
    } else {
    }
    %c0 = arith.constant 0 : index
    %c0_1 = arith.constant 0 : index
    %c0_2 = arith.constant 0 : index
    %3 = vector.load %arg1[%c0, %c0_1, %c0_2] : memref<1x8x16xf32, #tpu.memory_space<vmem>>, vector<1x8x16xf32>
    %4 = vector.shape_cast %3 : vector<1x8x16xf32> to vector<8x16xf32>
    %c0_3 = arith.constant 0 : index
    %c0_4 = arith.constant 0 : index
    %5 = vector.load %arg6[%c0_3, %c0_4] : memref<8x32xf32, #tpu.memory_space<vmem>>, vector<8x32xf32>
    %c0_5 = arith.constant 0 : index
    %c0_6 = arith.constant 0 : index
    %6 = vector.load %arg7[%c0_5, %c0_6] : memref<8x32xf32, #tpu.memory_space<vmem>>, vector<8x32xf32>
    %7 = tpu.concatenate %4, %5 in 1 : vector<8x16xf32>, vector<8x32xf32> -> vector<8x48xf32>
    %c0_7 = arith.constant 0 : index
    %c0_8 = arith.constant 0 : index
    %8 = vector.load %arg2[%c0_7, %c0_8] : memref<48x128xf32, #tpu.memory_space<vmem>>, vector<48x128xf32>
    %cst = arith.constant dense<0.000000e+00> : vector<8x128xf32>
    %9 = tpu.matmul %7, %8, %cst {dimension_numbers = #tpu.dot_dimension_numbers<[1], [0], [0], [1], [0, 0, 1, 1], [], []>} : vector<8x48xf32>, vector<48x128xf32>, vector<8x128xf32> -> vector<8x128xf32>
    %c0_9 = arith.constant 0 : index
    %c0_10 = arith.constant 0 : index
    %10 = vector.load %arg3[%c0_9, %c0_10] : memref<1x128xf32, #tpu.memory_space<vmem>>, vector<1x128xf32>
    %11 = vector.broadcast %10 : vector<1x128xf32> to vector<8x128xf32>
    %12 = arith.addf %9, %11 : vector<8x128xf32>
    %13 = vector.extract_strided_slice %12 {offsets = [0, 0], sizes = [8, 32], strides = [1, 1]} : vector<8x128xf32> to vector<8x32xf32>
    %14 = arith.negf %13 : vector<8x32xf32>
    %15 = math.exp %14 : vector<8x32xf32>
    %cst_11 = arith.constant 1.000000e+00 : f32
    %16 = vector.broadcast %cst_11 : f32 to vector<8x32xf32>
    %17 = arith.addf %16, %15 : vector<8x32xf32>
    %18 = arith.divf %16, %17 : vector<8x32xf32>
    %19 = vector.extract_strided_slice %12 {offsets = [0, 32], sizes = [8, 32], strides = [1, 1]} : vector<8x128xf32> to vector<8x32xf32>
    %20 = arith.negf %19 : vector<8x32xf32>
    %21 = math.exp %20 : vector<8x32xf32>
    %cst_12 = arith.constant 1.000000e+00 : f32
    %22 = vector.broadcast %cst_12 : f32 to vector<8x32xf32>
    %23 = arith.addf %22, %21 : vector<8x32xf32>
    %24 = arith.divf %22, %23 : vector<8x32xf32>
    %25 = vector.extract_strided_slice %12 {offsets = [0, 64], sizes = [8, 32], strides = [1, 1]} : vector<8x128xf32> to vector<8x32xf32>
    %26 = math.tanh %25 : vector<8x32xf32>
    %27 = vector.extract_strided_slice %12 {offsets = [0, 96], sizes = [8, 32], strides = [1, 1]} : vector<8x128xf32> to vector<8x32xf32>
    %28 = arith.negf %27 : vector<8x32xf32>
    %29 = math.exp %28 : vector<8x32xf32>
    %cst_13 = arith.constant 1.000000e+00 : f32
    %30 = vector.broadcast %cst_13 : f32 to vector<8x32xf32>
    %31 = arith.addf %30, %29 : vector<8x32xf32>
    %32 = arith.divf %30, %31 : vector<8x32xf32>
    %33 = arith.mulf %24, %6 : vector<8x32xf32>
    %34 = arith.mulf %18, %26 : vector<8x32xf32>
    %35 = arith.addf %33, %34 : vector<8x32xf32>
    %36 = math.tanh %35 : vector<8x32xf32>
    %37 = arith.mulf %32, %36 : vector<8x32xf32>
    %c0_14 = arith.constant 0 : index
    %c0_15 = arith.constant 0 : index
    %38 = vector.load %arg6[%c0_14, %c0_15] : memref<8x32xf32, #tpu.memory_space<vmem>>, vector<8x32xf32>
    tpu.vector_store %arg6[%c0_14, %c0_15], %37 {strides = array<i32>} : memref<8x32xf32, #tpu.memory_space<vmem>>, vector<8x32xf32>,
    %c0_16 = arith.constant 0 : index
    %c0_17 = arith.constant 0 : index
    %39 = vector.load %arg7[%c0_16, %c0_17] : memref<8x32xf32, #tpu.memory_space<vmem>>, vector<8x32xf32>
    tpu.vector_store %arg7[%c0_16, %c0_17], %35 {strides = array<i32>} : memref<8x32xf32, #tpu.memory_space<vmem>>, vector<8x32xf32>,
    %c0_18 = arith.constant 0 : index
    %c0_19 = arith.constant 0 : index
    %c0_20 = arith.constant 0 : index
    %40 = vector.load %arg4[%c0_18, %c0_19, %c0_20] : memref<1x8x32xf32, #tpu.memory_space<vmem>>, vector<1x8x32xf32>
    %41 = vector.shape_cast %40 : vector<1x8x32xf32> to vector<8x32xf32>
    %42 = vector.shape_cast %37 : vector<8x32xf32> to vector<1x8x32xf32>
    tpu.vector_store %arg4[%c0_18, %c0_19, %c0_20], %42 {strides = array<i32>} : memref<1x8x32xf32, #tpu.memory_space<vmem>>, vector<1x8x32xf32>,
    %c0_21 = arith.constant 0 : index
    %c0_22 = arith.constant 0 : index
    %43 = vector.load %arg5[%c0_21, %c0_22] : memref<8x32xf32, #tpu.memory_space<vmem>>, vector<8x32xf32>
    tpu.vector_store %arg5[%c0_21, %c0_22], %37 {strides = array<i32>} : memref<8x32xf32, #tpu.memory_space<vmem>>, vector<8x32xf32>,
    return
  }
  func.func @transform_0(%arg0: i32) -> (i32, i32, i32) {
    %c0_i32 = arith.constant 0 : i32
    %c0_i32_0 = arith.constant 0 : i32
    %c0_i32_1 = arith.constant 0 : i32
    return %arg0, %c0_i32, %c0_i32_0 : i32, i32, i32
  }
  func.func @transform_1(%arg0: i32) -> (i32, i32) {
    %c0_i32 = arith.constant 0 : i32
    %c0_i32_0 = arith.constant 0 : i32
    %c0_i32_1 = arith.constant 0 : i32
    return %c0_i32, %c0_i32_0 : i32, i32
  }
  func.func @transform_2(%arg0: i32) -> (i32, i32) {
    %c0_i32 = arith.constant 0 : i32
    %c0_i32_0 = arith.constant 0 : i32
    %c0_i32_1 = arith.constant 0 : i32
    return %c0_i32, %c0_i32_0 : i32, i32
  }
  func.func @transform_3(%arg0: i32) -> (i32, i32, i32) {
    %c0_i32 = arith.constant 0 : i32
    %c0_i32_0 = arith.constant 0 : i32
    %c0_i32_1 = arith.constant 0 : i32
    return %arg0, %c0_i32, %c0_i32_0 : i32, i32, i32
  }
  func.func @transform_4(%arg0: i32) -> (i32, i32) {
    %c0_i32 = arith.constant 0 : i32
    %c0_i32_0 = arith.constant 0 : i32
    %c0_i32_1 = arith.constant 0 : i32
    return %c0_i32, %c0_i32_0 : i32, i32
  }
}

module attributes {stable_mosaic.version = 11 : i64} {
  func.func @_decoder_kernel(%arg0: i32, %arg1: memref<8x8x1xf32, #tpu.memory_space<vmem>>, %arg2: memref<8x8x16xf32, #tpu.memory_space<vmem>>, %arg3: memref<8x32xf32, #tpu.memory_space<vmem>>, %arg4: memref<8x8x32xf32, #tpu.memory_space<vmem>>, %arg5: memref<8x8x32xf32, #tpu.memory_space<vmem>>, %arg6: memref<128x16xf32, #tpu.memory_space<vmem>>, %arg7: memref<32x32xf32, #tpu.memory_space<vmem>>, %arg8: memref<1x32xf32, #tpu.memory_space<vmem>>, %arg9: memref<48x96xf32, #tpu.memory_space<vmem>>, %arg10: memref<32x96xf32, #tpu.memory_space<vmem>>, %arg11: memref<1x96xf32, #tpu.memory_space<vmem>>, %arg12: memref<1x96xf32, #tpu.memory_space<vmem>>, %arg13: memref<80x128xf32, #tpu.memory_space<vmem>>, %arg14: memref<1x128xf32, #tpu.memory_space<vmem>>, %arg15: memref<1x8x128xf32, #tpu.memory_space<vmem>>, %arg16: memref<8x32xf32, #tpu.memory_space<vmem>>, %arg17: memref<8x16xf32, #tpu.memory_space<vmem>>) attributes {dimension_semantics = [#tpu.dimension_semantics<arbitrary>], iteration_bounds = array<i64: 7>, scalar_prefetch = 0 : i64, scratch_operands = 2 : i64, tpu.core_type = #tpu.core_type<tc>, window_params = [{pipeline_mode = #tpu.pipeline_mode<synchronous>, transform_indices = @transform_0, window_bounds = array<i64: 8, 8, 1>}, {pipeline_mode = #tpu.pipeline_mode<synchronous>, transform_indices = @transform_1, window_bounds = array<i64: 8, 8, 16>}, {pipeline_mode = #tpu.pipeline_mode<synchronous>, transform_indices = @transform_2, window_bounds = array<i64: 8, 32>}, {pipeline_mode = #tpu.pipeline_mode<synchronous>, transform_indices = @transform_3, window_bounds = array<i64: 8, 8, 32>}, {pipeline_mode = #tpu.pipeline_mode<synchronous>, transform_indices = @transform_4, window_bounds = array<i64: 8, 8, 32>}, {pipeline_mode = #tpu.pipeline_mode<synchronous>, transform_indices = @transform_5, window_bounds = array<i64: 128, 16>}, {pipeline_mode = #tpu.pipeline_mode<synchronous>, transform_indices = @transform_6, window_bounds = array<i64: 32, 32>}, {pipeline_mode = #tpu.pipeline_mode<synchronous>, transform_indices = @transform_7, window_bounds = array<i64: 1, 32>}, {pipeline_mode = #tpu.pipeline_mode<synchronous>, transform_indices = @transform_8, window_bounds = array<i64: 48, 96>}, {pipeline_mode = #tpu.pipeline_mode<synchronous>, transform_indices = @transform_9, window_bounds = array<i64: 32, 96>}, {pipeline_mode = #tpu.pipeline_mode<synchronous>, transform_indices = @transform_10, window_bounds = array<i64: 1, 96>}, {pipeline_mode = #tpu.pipeline_mode<synchronous>, transform_indices = @transform_11, window_bounds = array<i64: 1, 96>}, {pipeline_mode = #tpu.pipeline_mode<synchronous>, transform_indices = @transform_12, window_bounds = array<i64: 80, 128>}, {pipeline_mode = #tpu.pipeline_mode<synchronous>, transform_indices = @transform_13, window_bounds = array<i64: 1, 128>}, {transform_indices = @transform_14, window_bounds = array<i64: 1, 8, 128>}]} {
    %c0_i32 = arith.constant 0 : i32
    %0 = arith.cmpi eq, %arg0, %c0_i32 : i32
    %1 = arith.extui %0 : i1 to i32
    %c0_i32_0 = arith.constant 0 : i32
    %2 = arith.cmpi ne, %1, %c0_i32_0 : i32
    scf.if %2 {
      %c0_54 = arith.constant 0 : index
      %c0_55 = arith.constant 0 : index
      %108 = vector.load %arg3[%c0_54, %c0_55] : memref<8x32xf32, #tpu.memory_space<vmem>>, vector<8x32xf32>
      %c0_56 = arith.constant 0 : index
      %c0_57 = arith.constant 0 : index
      %109 = vector.load %arg16[%c0_56, %c0_57] : memref<8x32xf32, #tpu.memory_space<vmem>>, vector<8x32xf32>
      tpu.vector_store %arg16[%c0_56, %c0_57], %108 {strides = array<i32>} : memref<8x32xf32, #tpu.memory_space<vmem>>, vector<8x32xf32>,
      %c0_58 = arith.constant 0 : index
      %c0_59 = arith.constant 0 : index
      %c0_60 = arith.constant 0 : index
      %110 = vector.load %arg2[%c0_58, %c0_59, %c0_60] : memref<8x8x16xf32, #tpu.memory_space<vmem>>, vector<1x8x16xf32>
      %111 = vector.shape_cast %110 : vector<1x8x16xf32> to vector<8x16xf32>
      %c0_61 = arith.constant 0 : index
      %c0_62 = arith.constant 0 : index
      %112 = vector.load %arg17[%c0_61, %c0_62] : memref<8x16xf32, #tpu.memory_space<vmem>>, vector<8x16xf32>
      tpu.vector_store %arg17[%c0_61, %c0_62], %111 {strides = array<i32>} : memref<8x16xf32, #tpu.memory_space<vmem>>, vector<8x16xf32>,
    } else {
    }
    %c0 = arith.constant 0 : index
    %c0_1 = arith.constant 0 : index
    %3 = vector.load %arg17[%c0, %c0_1] : memref<8x16xf32, #tpu.memory_space<vmem>>, vector<8x16xf32>
    %c0_2 = arith.constant 0 : index
    %c0_3 = arith.constant 0 : index
    %4 = vector.load %arg16[%c0_2, %c0_3] : memref<8x32xf32, #tpu.memory_space<vmem>>, vector<8x32xf32>
    %c0_4 = arith.constant 0 : index
    %c0_5 = arith.constant 0 : index
    %c0_6 = arith.constant 0 : index
    %5 = vector.load %arg4[%c0_4, %c0_5, %c0_6] : memref<8x8x32xf32, #tpu.memory_space<vmem>>, vector<8x8x32xf32>
    %c0_7 = arith.constant 0 : index
    %c0_8 = arith.constant 0 : index
    %6 = vector.load %arg7[%c0_7, %c0_8] : memref<32x32xf32, #tpu.memory_space<vmem>>, vector<32x32xf32>
    %cst = arith.constant dense<0.000000e+00> : vector<8x32xf32>
    %7 = tpu.matmul %4, %6, %cst {dimension_numbers = #tpu.dot_dimension_numbers<[1], [0], [0], [1], [0, 0, 1, 1], [], []>} : vector<8x32xf32>, vector<32x32xf32>, vector<8x32xf32> -> vector<8x32xf32>
    %c0_9 = arith.constant 0 : index
    %c0_10 = arith.constant 0 : index
    %c0_11 = arith.constant 0 : index
    %8 = vector.load %arg5[%c0_9, %c0_10, %c0_11] : memref<8x8x32xf32, #tpu.memory_space<vmem>>, vector<8x8x32xf32>
    %9 = vector.shape_cast %7 : vector<8x32xf32> to vector<8x1x32xf32>
    %10 = vector.broadcast %9 : vector<8x1x32xf32> to vector<8x8x32xf32>
    %11 = arith.addf %8, %10 : vector<8x8x32xf32>
    %12 = math.tanh %11 : vector<8x8x32xf32>
    %c0_12 = arith.constant 0 : index
    %c0_13 = arith.constant 0 : index
    %13 = vector.load %arg8[%c0_12, %c0_13] : memref<1x32xf32, #tpu.memory_space<vmem>>, vector<1x32xf32>
    %14 = vector.shape_cast %13 : vector<1x32xf32> to vector<1x1x32xf32>
    %15 = vector.broadcast %14 : vector<1x1x32xf32> to vector<8x8x32xf32>
    %16 = arith.mulf %12, %15 : vector<8x8x32xf32>
    %cst_14 = arith.constant dense<0.000000e+00> : vector<8x8xf32>
    %17 = vector.multi_reduction <add>, %16, %cst_14 [2] : vector<8x8x32xf32> to vector<8x8xf32>
    %cst_15 = arith.constant dense<0xFF800000> : vector<8xf32>
    %18 = vector.multi_reduction <maximumf>, %17, %cst_15 [1] : vector<8x8xf32> to vector<8xf32>
    %19 = vector.shape_cast %18 : vector<8xf32> to vector<8x1xf32>
    %20 = vector.broadcast %19 : vector<8x1xf32> to vector<8x8xf32>
    %21 = arith.subf %17, %20 : vector<8x8xf32>
    %22 = math.exp %21 : vector<8x8xf32>
    %cst_16 = arith.constant dense<0.000000e+00> : vector<8xf32>
    %23 = vector.multi_reduction <add>, %22, %cst_16 [1] : vector<8x8xf32> to vector<8xf32>
    %24 = vector.shape_cast %23 : vector<8xf32> to vector<8x1xf32>
    %25 = vector.broadcast %24 : vector<8x1xf32> to vector<8x8xf32>
    %26 = arith.divf %22, %25 : vector<8x8xf32>
    %27 = vector.shape_cast %26 : vector<8x8xf32> to vector<8x1x8xf32>
    "tpu.trace_start"() <{level = 10 : i32, message = "bks,bsh->bkh"}> : () -> ()
    %cst_17 = arith.constant dense<0.000000e+00> : vector<8x1x32xf32>
    %28 = tpu.matmul %27, %5, %cst_17 {dimension_numbers = #tpu.dot_dimension_numbers<[2], [1], [1], [2], [0, 0, 0, 1, 1, 2], [0], [0]>} : vector<8x1x8xf32>, vector<8x8x32xf32>, vector<8x1x32xf32> -> vector<8x1x32xf32>
    "tpu.trace_stop"() : () -> ()
    %29 = vector.shape_cast %28 : vector<8x1x32xf32> to vector<8x32xf32>
    %30 = tpu.concatenate %3, %29 in 1 : vector<8x16xf32>, vector<8x32xf32> -> vector<8x48xf32>
    %c0_18 = arith.constant 0 : index
    %c0_19 = arith.constant 0 : index
    %31 = vector.load %arg9[%c0_18, %c0_19] : memref<48x96xf32, #tpu.memory_space<vmem>>, vector<48x96xf32>
    %cst_20 = arith.constant dense<0.000000e+00> : vector<8x96xf32>
    %32 = tpu.matmul %30, %31, %cst_20 {dimension_numbers = #tpu.dot_dimension_numbers<[1], [0], [0], [1], [0, 0, 1, 1], [], []>} : vector<8x48xf32>, vector<48x96xf32>, vector<8x96xf32> -> vector<8x96xf32>
    %c0_21 = arith.constant 0 : index
    %c0_22 = arith.constant 0 : index
    %33 = vector.load %arg11[%c0_21, %c0_22] : memref<1x96xf32, #tpu.memory_space<vmem>>, vector<1x96xf32>
    %34 = vector.broadcast %33 : vector<1x96xf32> to vector<8x96xf32>
    %35 = arith.addf %32, %34 : vector<8x96xf32>
    %c0_23 = arith.constant 0 : index
    %c0_24 = arith.constant 0 : index
    %36 = vector.load %arg10[%c0_23, %c0_24] : memref<32x96xf32, #tpu.memory_space<vmem>>, vector<32x96xf32>
    %cst_25 = arith.constant dense<0.000000e+00> : vector<8x96xf32>
    %37 = tpu.matmul %4, %36, %cst_25 {dimension_numbers = #tpu.dot_dimension_numbers<[1], [0], [0], [1], [0, 0, 1, 1], [], []>} : vector<8x32xf32>, vector<32x96xf32>, vector<8x96xf32> -> vector<8x96xf32>
    %c0_26 = arith.constant 0 : index
    %c0_27 = arith.constant 0 : index
    %38 = vector.load %arg12[%c0_26, %c0_27] : memref<1x96xf32, #tpu.memory_space<vmem>>, vector<1x96xf32>
    %39 = vector.broadcast %38 : vector<1x96xf32> to vector<8x96xf32>
    %40 = arith.addf %37, %39 : vector<8x96xf32>
    %41 = vector.extract_strided_slice %35 {offsets = [0, 0], sizes = [8, 32], strides = [1, 1]} : vector<8x96xf32> to vector<8x32xf32>
    %42 = vector.extract_strided_slice %40 {offsets = [0, 0], sizes = [8, 32], strides = [1, 1]} : vector<8x96xf32> to vector<8x32xf32>
    %43 = arith.addf %41, %42 : vector<8x32xf32>
    %44 = arith.negf %43 : vector<8x32xf32>
    %45 = math.exp %44 : vector<8x32xf32>
    %cst_28 = arith.constant 1.000000e+00 : f32
    %46 = vector.broadcast %cst_28 : f32 to vector<8x32xf32>
    %47 = arith.addf %46, %45 : vector<8x32xf32>
    %48 = arith.divf %46, %47 : vector<8x32xf32>
    %49 = vector.extract_strided_slice %35 {offsets = [0, 32], sizes = [8, 32], strides = [1, 1]} : vector<8x96xf32> to vector<8x32xf32>
    %50 = vector.extract_strided_slice %40 {offsets = [0, 32], sizes = [8, 32], strides = [1, 1]} : vector<8x96xf32> to vector<8x32xf32>
    %51 = arith.addf %49, %50 : vector<8x32xf32>
    %52 = arith.negf %51 : vector<8x32xf32>
    %53 = math.exp %52 : vector<8x32xf32>
    %cst_29 = arith.constant 1.000000e+00 : f32
    %54 = vector.broadcast %cst_29 : f32 to vector<8x32xf32>
    %55 = arith.addf %54, %53 : vector<8x32xf32>
    %56 = arith.divf %54, %55 : vector<8x32xf32>
    %57 = vector.extract_strided_slice %35 {offsets = [0, 64], sizes = [8, 32], strides = [1, 1]} : vector<8x96xf32> to vector<8x32xf32>
    %58 = vector.extract_strided_slice %40 {offsets = [0, 64], sizes = [8, 32], strides = [1, 1]} : vector<8x96xf32> to vector<8x32xf32>
    %59 = arith.mulf %48, %58 : vector<8x32xf32>
    %60 = arith.addf %57, %59 : vector<8x32xf32>
    %61 = math.tanh %60 : vector<8x32xf32>
    %cst_30 = arith.constant 1.000000e+00 : f32
    %62 = vector.broadcast %cst_30 : f32 to vector<8x32xf32>
    %63 = arith.subf %62, %56 : vector<8x32xf32>
    %64 = arith.mulf %63, %61 : vector<8x32xf32>
    %65 = arith.mulf %56, %4 : vector<8x32xf32>
    %66 = arith.addf %64, %65 : vector<8x32xf32>
    %67 = tpu.concatenate %66, %29, %3 in 1 : vector<8x32xf32>, vector<8x32xf32>, vector<8x16xf32> -> vector<8x80xf32>
    %c0_31 = arith.constant 0 : index
    %c0_32 = arith.constant 0 : index
    %68 = vector.load %arg13[%c0_31, %c0_32] : memref<80x128xf32, #tpu.memory_space<vmem>>, vector<80x128xf32>
    %cst_33 = arith.constant dense<0.000000e+00> : vector<8x128xf32>
    %69 = tpu.matmul %67, %68, %cst_33 {dimension_numbers = #tpu.dot_dimension_numbers<[1], [0], [0], [1], [0, 0, 1, 1], [], []>} : vector<8x80xf32>, vector<80x128xf32>, vector<8x128xf32> -> vector<8x128xf32>
    %c0_34 = arith.constant 0 : index
    %c0_35 = arith.constant 0 : index
    %70 = vector.load %arg14[%c0_34, %c0_35] : memref<1x128xf32, #tpu.memory_space<vmem>>, vector<1x128xf32>
    %71 = vector.broadcast %70 : vector<1x128xf32> to vector<8x128xf32>
    %72 = arith.addf %69, %71 : vector<8x128xf32>
    %c0_36 = arith.constant 0 : index
    %c0_37 = arith.constant 0 : index
    %c0_38 = arith.constant 0 : index
    %73 = vector.load %arg15[%c0_36, %c0_37, %c0_38] : memref<1x8x128xf32, #tpu.memory_space<vmem>>, vector<1x8x128xf32>
    %74 = vector.shape_cast %73 : vector<1x8x128xf32> to vector<8x128xf32>
    %75 = vector.shape_cast %72 : vector<8x128xf32> to vector<1x8x128xf32>
    tpu.vector_store %arg15[%c0_36, %c0_37, %c0_38], %75 {strides = array<i32>} : memref<1x8x128xf32, #tpu.memory_space<vmem>>, vector<1x8x128xf32>,
    %c0_39 = arith.constant 0 : index
    %c0_40 = arith.constant 0 : index
    %76 = vector.load %arg16[%c0_39, %c0_40] : memref<8x32xf32, #tpu.memory_space<vmem>>, vector<8x32xf32>
    tpu.vector_store %arg16[%c0_39, %c0_40], %66 {strides = array<i32>} : memref<8x32xf32, #tpu.memory_space<vmem>>, vector<8x32xf32>,
    %77 = tpu.iota {dimensions = array<i32: 1>} : vector<8x128xi32>
    %cst_41 = arith.constant dense<0xFF800000> : vector<8xf32>
    %78 = vector.multi_reduction <maximumf>, %72, %cst_41 [1] : vector<8x128xf32> to vector<8xf32>
    %79 = vector.shape_cast %78 : vector<8xf32> to vector<8x1xf32>
    %80 = vector.broadcast %79 : vector<8x1xf32> to vector<8x128xf32>
    %81 = arith.cmpf oeq, %72, %80 : vector<8x128xf32>
    %c128_i32 = arith.constant 128 : i32
    %82 = vector.broadcast %c128_i32 : i32 to vector<8x128xi32>
    %83 = arith.select %81, %77, %82 : vector<8x128xi1>, vector<8x128xi32>
    %cst_42 = arith.constant dense<2147483647> : vector<8xi32>
    %84 = vector.multi_reduction <minsi>, %83, %cst_42 [1] : vector<8x128xi32> to vector<8xi32>
    %85 = vector.shape_cast %84 : vector<8xi32> to vector<8x1xi32>
    %86 = vector.broadcast %85 : vector<8x1xi32> to vector<8x128xi32>
    %87 = arith.cmpi eq, %77, %86 : vector<8x128xi32>
    %88 = arith.extui %87 : vector<8x128xi1> to vector<8x128xi32>
    %89 = arith.sitofp %88 : vector<8x128xi32> to vector<8x128xf32>
    %c0_43 = arith.constant 0 : index
    %c0_44 = arith.constant 0 : index
    %90 = vector.load %arg6[%c0_43, %c0_44] : memref<128x16xf32, #tpu.memory_space<vmem>>, vector<128x16xf32>
    %cst_45 = arith.constant dense<0.000000e+00> : vector<8x16xf32>
    %91 = tpu.matmul %89, %90, %cst_45 {dimension_numbers = #tpu.dot_dimension_numbers<[1], [0], [0], [1], [0, 0, 1, 1], [], []>} : vector<8x128xf32>, vector<128x16xf32>, vector<8x16xf32> -> vector<8x16xf32>
    %c1_i32 = arith.constant 1 : i32
    %92 = arith.addi %arg0, %c1_i32 : i32
    %93 = arith.index_cast %92 : i32 to index
    %c0_46 = arith.constant 0 : index
    %c0_47 = arith.constant 0 : index
    %94 = vector.load %arg1[%93, %c0_46, %c0_47] : memref<8x8x1xf32, #tpu.memory_space<vmem>>, vector<1x8x1xf32>
    %95 = vector.shape_cast %94 : vector<1x8x1xf32> to vector<8x1xf32>
    %c1_i32_48 = arith.constant 1 : i32
    %96 = arith.addi %arg0, %c1_i32_48 : i32
    %97 = arith.index_cast %96 : i32 to index
    %c0_49 = arith.constant 0 : index
    %c0_50 = arith.constant 0 : index
    %98 = vector.load %arg2[%97, %c0_49, %c0_50] : memref<8x8x16xf32, #tpu.memory_space<vmem>>, vector<1x8x16xf32>
    %99 = vector.shape_cast %98 : vector<1x8x16xf32> to vector<8x16xf32>
    %100 = vector.broadcast %95 : vector<8x1xf32> to vector<8x16xf32>
    %101 = arith.mulf %100, %99 : vector<8x16xf32>
    %cst_51 = arith.constant 1.000000e+00 : f32
    %102 = vector.broadcast %cst_51 : f32 to vector<8x1xf32>
    %103 = arith.subf %102, %95 : vector<8x1xf32>
    %104 = vector.broadcast %103 : vector<8x1xf32> to vector<8x16xf32>
    %105 = arith.mulf %104, %91 : vector<8x16xf32>
    %106 = arith.addf %101, %105 : vector<8x16xf32>
    %c0_52 = arith.constant 0 : index
    %c0_53 = arith.constant 0 : index
    %107 = vector.load %arg17[%c0_52, %c0_53] : memref<8x16xf32, #tpu.memory_space<vmem>>, vector<8x16xf32>
    tpu.vector_store %arg17[%c0_52, %c0_53], %106 {strides = array<i32>} : memref<8x16xf32, #tpu.memory_space<vmem>>, vector<8x16xf32>,
    return
  }
  func.func @transform_0(%arg0: i32) -> (i32, i32, i32) {
    %c0_i32 = arith.constant 0 : i32
    %c0_i32_0 = arith.constant 0 : i32
    %c0_i32_1 = arith.constant 0 : i32
    %c0_i32_2 = arith.constant 0 : i32
    return %c0_i32, %c0_i32_0, %c0_i32_1 : i32, i32, i32
  }
  func.func @transform_1(%arg0: i32) -> (i32, i32, i32) {
    %c0_i32 = arith.constant 0 : i32
    %c0_i32_0 = arith.constant 0 : i32
    %c0_i32_1 = arith.constant 0 : i32
    %c0_i32_2 = arith.constant 0 : i32
    return %c0_i32, %c0_i32_0, %c0_i32_1 : i32, i32, i32
  }
  func.func @transform_2(%arg0: i32) -> (i32, i32) {
    %c0_i32 = arith.constant 0 : i32
    %c0_i32_0 = arith.constant 0 : i32
    %c0_i32_1 = arith.constant 0 : i32
    return %c0_i32, %c0_i32_0 : i32, i32
  }
  func.func @transform_3(%arg0: i32) -> (i32, i32, i32) {
    %c0_i32 = arith.constant 0 : i32
    %c0_i32_0 = arith.constant 0 : i32
    %c0_i32_1 = arith.constant 0 : i32
    %c0_i32_2 = arith.constant 0 : i32
    return %c0_i32, %c0_i32_0, %c0_i32_1 : i32, i32, i32
  }
  func.func @transform_4(%arg0: i32) -> (i32, i32, i32) {
    %c0_i32 = arith.constant 0 : i32
    %c0_i32_0 = arith.constant 0 : i32
    %c0_i32_1 = arith.constant 0 : i32
    %c0_i32_2 = arith.constant 0 : i32
    return %c0_i32, %c0_i32_0, %c0_i32_1 : i32, i32, i32
  }
  func.func @transform_5(%arg0: i32) -> (i32, i32) {
    %c0_i32 = arith.constant 0 : i32
    %c0_i32_0 = arith.constant 0 : i32
    %c0_i32_1 = arith.constant 0 : i32
    return %c0_i32, %c0_i32_0 : i32, i32
  }
  func.func @transform_6(%arg0: i32) -> (i32, i32) {
    %c0_i32 = arith.constant 0 : i32
    %c0_i32_0 = arith.constant 0 : i32
    %c0_i32_1 = arith.constant 0 : i32
    return %c0_i32, %c0_i32_0 : i32, i32
  }
  func.func @transform_7(%arg0: i32) -> (i32, i32) {
    %c0_i32 = arith.constant 0 : i32
    %c0_i32_0 = arith.constant 0 : i32
    %c0_i32_1 = arith.constant 0 : i32
    return %c0_i32, %c0_i32_0 : i32, i32
  }
  func.func @transform_8(%arg0: i32) -> (i32, i32) {
    %c0_i32 = arith.constant 0 : i32
    %c0_i32_0 = arith.constant 0 : i32
    %c0_i32_1 = arith.constant 0 : i32
    return %c0_i32, %c0_i32_0 : i32, i32
  }
  func.func @transform_9(%arg0: i32) -> (i32, i32) {
    %c0_i32 = arith.constant 0 : i32
    %c0_i32_0 = arith.constant 0 : i32
    %c0_i32_1 = arith.constant 0 : i32
    return %c0_i32, %c0_i32_0 : i32, i32
  }
  func.func @transform_10(%arg0: i32) -> (i32, i32) {
    %c0_i32 = arith.constant 0 : i32
    %c0_i32_0 = arith.constant 0 : i32
    %c0_i32_1 = arith.constant 0 : i32
    return %c0_i32, %c0_i32_0 : i32, i32
  }
  func.func @transform_11(%arg0: i32) -> (i32, i32) {
    %c0_i32 = arith.constant 0 : i32
    %c0_i32_0 = arith.constant 0 : i32
    %c0_i32_1 = arith.constant 0 : i32
    return %c0_i32, %c0_i32_0 : i32, i32
  }
  func.func @transform_12(%arg0: i32) -> (i32, i32) {
    %c0_i32 = arith.constant 0 : i32
    %c0_i32_0 = arith.constant 0 : i32
    %c0_i32_1 = arith.constant 0 : i32
    return %c0_i32, %c0_i32_0 : i32, i32
  }
  func.func @transform_13(%arg0: i32) -> (i32, i32) {
    %c0_i32 = arith.constant 0 : i32
    %c0_i32_0 = arith.constant 0 : i32
    %c0_i32_1 = arith.constant 0 : i32
    return %c0_i32, %c0_i32_0 : i32, i32
  }
  func.func @transform_14(%arg0: i32) -> (i32, i32, i32) {
    %c0_i32 = arith.constant 0 : i32
    %c0_i32_0 = arith.constant 0 : i32
    %c0_i32_1 = arith.constant 0 : i32
    return %arg0, %c0_i32, %c0_i32_0 : i32, i32, i32
  }
}

</mosaic_0001>

<llo_original>
// kernel: _forward.2
$region0: #{_forward.2}
  #allocation0 [shape = 'u32[]', space=smem, size = 0x4, offset = 0x4, fixed_abs, tag = 'smem constant byte address 0x4 - core index']
  #allocation1 [shape = 'u32[144,128]{1,0:T(1,128)}', space=vmem, size = 0x12000, scoped, tag = 'internal scratch']
  #allocation2 [shape = 'f32[8,32]{1,0:T(8,128)}', space=vmem, size = 0x1000, scoped, tag = 'scratch operand']
  #allocation3 [shape = 'f32[8,32]{1,0:T(8,128)}', space=vmem, size = 0x1000, scoped, tag = 'scratch operand']
  %s0 = inlined_call_operand.vmem [shape: f32[8,8,16], index: 0, kind: input, shape index: {}]
  %s1 = inlined_call_operand.vmem [shape: f32[48,128], index: 1, kind: input, shape index: {}]
  %s2 = inlined_call_operand.vmem [shape: f32[1,128], index: 2, kind: input, shape index: {}]
  %s3 = inlined_call_operand.vmem [shape: f32[8,8,32], index: 3, kind: output, shape index: {0}]
  %s4 = inlined_call_operand.vmem [shape: f32[8,32], index: 4, kind: output, shape index: {1}]
  %5 = xla_tuple %s3, %s4
  %s6 = sld [smem:[#allocation0]]
  $region57: #{_forward.2} parent=0
    _
  %s8 = ssub.s32 1, %s6
  %s9 = scalar_select 0, %s8, %s6
  loop: start=0, step=1, limit=10
  $region2: #{_forward.2} parent=0 // loop_pre_header
    _
  $region3: #{_forward.2} parent=0 // loop_header
    %s11 = sphi 0, %s15
    %p12 = scmp.ge.s32.totalorder %s11, 10
    %s21 = sphi 0, %s23
    %s24 = sphi 0, %s21
    %s25 = sphi 0, %s24
    %s41 = sphi 0, %s25
    %s45 = sphi 0, %s45
    %s47 = sphi 0, %s45
    %s48 = sphi 0, %s47
    %s62 = sphi 0, %s48
    %s66 = sphi 0, %s66
    %s68 = sphi 0, %s66
    %s69 = sphi 0, %s68
    %s83 = sphi 0, %s69
    %s89 = sphi 0, %s91
    %s92 = sphi 0, %s89
    %s93 = sphi 0, %s92
    %s109 = sphi 0, %s93
    %s113 = sphi 0, %s113
    %s115 = sphi 0, %s113
    %s116 = sphi 0, %s115
    %s130 = sphi 0, %s116
  $region4: #{_forward.2} parent=0 // loop_header_branch
    %14 = sbr.rel (%p12) target = $region8
  $region5: #{_forward.2} parent=0 // loop_body
    %s16 = ssub.s32 %s11, 1
    %s17 = ssub.s32 %s11, 2
    %s18 = sadd.s32 %s11, 1
    %s19 = ssub.s32 %s11, %s18
    %p20 = scmp.eq.s32.totalorder %s19, 0
    %s22 = sadd.s32 %s21, 1
    %s23 = scalar_select %p20, %s21, %s22
    %p26 = pneg %p20
    %p27 = scmp.eq.s32.totalorder %s11, 7
    %p28 = por %p26, %p27
    %p29 = scmp.ne.s32.totalorder %s21, %s24
    %p30 = scmp.eq.s32.totalorder %s11, 0
    %p31 = por %p29, %p30
    %p32 = scmp.ne.s32.totalorder %s21, %s24
    %p33 = scmp.eq.s32.totalorder %s16, 7
    %p34 = por %p32, %p33
    %p35 = scmp.ne.s32.totalorder %s24, %s25
    %p36 = scmp.eq.s32.totalorder %s16, 0
    %p37 = por %p35, %p36
    %p38 = scmp.ne.s32.totalorder %s24, %s25
    %p39 = scmp.eq.s32.totalorder %s17, 7
    %p40 = por %p38, %p39
    %p42 = scmp.ne.s32.totalorder %s25, %s41
    %p43 = scmp.eq.s32.totalorder %s17, 0
    %p44 = por %p42, %p43
    %s46 = sadd.s32 %s45, 1
    %p49 = scmp.eq.s32.totalorder %s11, 7
    %p50 = scmp.ne.s32.totalorder %s45, %s47
    %p51 = scmp.eq.s32.totalorder %s11, 0
    %p52 = por %p50, %p51
    %p53 = scmp.ne.s32.totalorder %s45, %s47
    %p54 = scmp.eq.s32.totalorder %s16, 7
    %p55 = por %p53, %p54
    %p56 = scmp.ne.s32.totalorder %s47, %s48
    %p57 = scmp.eq.s32.totalorder %s16, 0
    %p58 = por %p56, %p57
    %p59 = scmp.ne.s32.totalorder %s47, %s48
    %p60 = scmp.eq.s32.totalorder %s17, 7
    %p61 = por %p59, %p60
    %p63 = scmp.ne.s32.totalorder %s48, %s62
    %p64 = scmp.eq.s32.totalorder %s17, 0
    %p65 = por %p63, %p64
    %s67 = sadd.s32 %s66, 1
    %p70 = scmp.eq.s32.totalorder %s11, 7
    %p71 = scmp.ne.s32.totalorder %s66, %s68
    %p72 = scmp.eq.s32.totalorder %s11, 0
    %p73 = por %p71, %p72
    %p74 = scmp.ne.s32.totalorder %s66, %s68
    %p75 = scmp.eq.s32.totalorder %s16, 7
    %p76 = por %p74, %p75
    %p77 = scmp.ne.s32.totalorder %s68, %s69
    %p78 = scmp.eq.s32.totalorder %s16, 0
    %p79 = por %p77, %p78
    %p80 = scmp.ne.s32.totalorder %s68, %s69
    %p81 = scmp.eq.s32.totalorder %s17, 7
    %p82 = por %p80, %p81
    %p84 = scmp.ne.s32.totalorder %s69, %s83
    %p85 = scmp.eq.s32.totalorder %s17, 0
    %p86 = por %p84, %p85
    %s87 = ssub.s32 %s11, %s18
    %p88 = scmp.eq.s32.totalorder %s87, 0
    %s90 = sadd.s32 %s89, 1
    %s91 = scalar_select %p88, %s89, %s90
    %p94 = pneg %p88
    %p95 = scmp.eq.s32.totalorder %s11, 7
    %p96 = por %p94, %p95
    %p97 = scmp.ne.s32.totalorder %s89, %s92
    %p98 = scmp.eq.s32.totalorder %s11, 0
    %p99 = por %p97, %p98
    %p100 = scmp.ne.s32.totalorder %s89, %s92
    %p101 = scmp.eq.s32.totalorder %s16, 7
    %p102 = por %p100, %p101
    %p103 = scmp.ne.s32.totalorder %s92, %s93
    %p104 = scmp.eq.s32.totalorder %s16, 0
    %p105 = por %p103, %p104
    %p106 = scmp.ne.s32.totalorder %s92, %s93
    %p107 = scmp.eq.s32.totalorder %s17, 7
    %p108 = por %p106, %p107
    %p110 = scmp.ne.s32.totalorder %s93, %s109
    %p111 = scmp.eq.s32.totalorder %s17, 0
    %p112 = por %p110, %p111
    %s114 = sadd.s32 %s113, 1
    %p117 = scmp.eq.s32.totalorder %s11, 7
    %p118 = scmp.ne.s32.totalorder %s113, %s115
    %p119 = scmp.eq.s32.totalorder %s11, 0
    %p120 = por %p118, %p119
    %p121 = scmp.ne.s32.totalorder %s113, %s115
    %p122 = scmp.eq.s32.totalorder %s16, 7
    %p123 = por %p121, %p122
    %p124 = scmp.ne.s32.totalorder %s115, %s116
    %p125 = scmp.eq.s32.totalorder %s16, 0
    %p126 = por %p124, %p125
    %p127 = scmp.ne.s32.totalorder %s115, %s116
    %p128 = scmp.eq.s32.totalorder %s17, 7
    %p129 = por %p127, %p128
    %p131 = scmp.ne.s32.totalorder %s116, %s130
    %p132 = scmp.eq.s32.totalorder %s17, 0
    %p133 = por %p131, %p132
    %p134 = scmp.le.s32.totalorder 1, %s11
    %p135 = scmp.lt.s32.totalorder %s11, 9
    %p136 = pnand %p134, %p135
    %p137 = pneg %p136
    // Predicated region
    $region9: #{_forward.2} parent=5 // pred_check
      _
    $region10: #{_forward.2} parent=5 // pred_check_branch
      %139 = sbr.rel (%p136) target = $region12
    $region11: #{_forward.2} parent=5 // pred_region
      %s140 = ssub.s32 %s11, 1
      // Predicated region
      $region13: #{_forward.2} parent=11 // pred_check
        %p141 = pneg %p58
      $region14: #{_forward.2} parent=11 // pred_check_branch
        %143 = sbr.rel (%p141) target = $region16
      $region15: #{_forward.2} parent=11 // pred_region
        _
      $region16: #{_forward.2} parent=11 // pred_fallthru
        _
      // Predicated region
      $region17: #{_forward.2} parent=11 // pred_check
        %p144 = pneg %p79
      $region18: #{_forward.2} parent=11 // pred_check_branch
        %146 = sbr.rel (%p144) target = $region20
      $region19: #{_forward.2} parent=11 // pred_region
        _
      $region20: #{_forward.2} parent=11 // pred_fallthru
        _
    $region12: #{_forward.2} parent=5 // pred_fallthru
      _
    %p147 = scmp.lt.s32.totalorder %s11, 8
    // Predicated region
    $region21: #{_forward.2} parent=5 // pred_check
      %p148 = pneg %p147
    $region22: #{_forward.2} parent=5 // pred_check_branch
      %150 = sbr.rel (%p148) target = $region24
    $region23: #{_forward.2} parent=5 // pred_region
      // Predicated region
      $region25: #{_forward.2} parent=23 // pred_check
        %p151 = pneg %p31
      $region26: #{_forward.2} parent=23 // pred_check_branch
        %153 = sbr.rel (%p151) target = $region28
      $region27: #{_forward.2} parent=23 // pred_region
        %p154 = scmp.lt.s32.totalorder %s11, 7
        %s155 = scalar_select %p154, %s11, 7
        %s156 = smul.addr %s155, 8
        %s157 = scalar_lea.vmem %s0, %s156
      $region28: #{_forward.2} parent=23 // pred_fallthru
        _
    $region24: #{_forward.2} parent=5 // pred_fallthru
      _
    %p158 = scmp.le.s32.totalorder 1, %s11
    %p159 = scmp.lt.s32.totalorder %s11, 9
    %p160 = pnand %p158, %p159
    %p161 = pneg %p160
    // Predicated region
    $region29: #{_forward.2} parent=5 // pred_check
      _
    $region30: #{_forward.2} parent=5 // pred_check_branch
      %163 = sbr.rel (%p160) target = $region32
    $region31: #{_forward.2} parent=5 // pred_region
      %s164 = ssub.s32 %s11, 1
      %p165 = scmp.lt.s32.totalorder %s16, 7
      %s166 = scalar_select %p165, %s16, 7
      %s167 = smul.addr %s166, 8
      %s168 = scalar_lea.vmem %s0, %s167
      %p169 = pneg %p37
      %p170 = pneg %p34
      %p171 = pneg %p58
      %p172 = pneg %p55
      %p173 = pneg %p79
      %p174 = pneg %p76
      %p175 = pneg %p105
      %p176 = pneg %p102
      %p177 = scmp.lt.s32.totalorder %s16, 7
      %s178 = scalar_select %p177, %s16, 7
      %s179 = smul.addr %s178, 8
      %s180 = scalar_lea.vmem %s3, %s179
      %p181 = pneg %p126
      %p182 = pneg %p123
      %p183 = scmp.lt.s32.totalorder %s16, 7
      %s184 = scalar_select %p183, %s16, 7
      %s185 = smul.addr %s184, 8
      %s186 = scalar_lea.vmem %s0, %s185
      %p187 = scmp.lt.s32.totalorder %s16, 7
      %s188 = scalar_select %p187, %s16, 7
      %s189 = smul.addr %s188, 8
      %s190 = scalar_lea.vmem %s3, %s189
      %p191 = scmp.eq.s32.totalorder %s16, 0
      // Predicated region
      $region33: #{_forward.2} parent=31 // pred_check
        %p192 = pneg %p191
      $region34: #{_forward.2} parent=31 // pred_check_branch
        %194 = sbr.rel (%p192) target = $region36
      $region35: #{_forward.2} parent=31 // pred_region
        %vm195 = vcmask 261120
        %196 = vst.msk [vmem:[#allocation2] sm:$0xff] %vm195, 0.0
        %197 = vst.msk [vmem:[#allocation3] sm:$0xff] %vm195, 0.0
      $region36: #{_forward.2} parent=31 // pred_fallthru
        _
      %v198 = vld [vmem:[%s186] sm:$0xff]
      %v199 = vld [vmem:[#allocation2] sm:$0xff]
      %v200 = vld [vmem:[#allocation3] sm:$0xff]
      %202 = vrot.lane.b32.xlu0 %v199, 16
      %v203 = vpop.permute.xlu0 %202
      %vm205 = vcmask 130048
      %v206 = vsel %vm205, %v198, %v203
      %v207 = vld [vmem:[%s1] sm:$0xff]
      %v208 = vld [vmem:[%s1 + $0x8] sm:$0xff]
      %v209 = vld [vmem:[%s1 + $0x10] sm:$0xff]
      %v210 = vld [vmem:[%s1 + $0x18] sm:$0xff]
      %v211 = vld [vmem:[%s1 + $0x20] sm:$0xff]
      %v212 = vld [vmem:[%s1 + $0x28] sm:$0xff]
      %v213 = vld [vmem:[%s2] sm:$0x1]
      %v215 = vlaneseq
      %v216 = vshrl.u32 %v215, 7
      %v217 = vsub.s32 0, %v216
      %v218 = vrot.slane %v213, %v217
      %vm220 = vcmask 392192
      %v222 = vsel %vm220, %v206, 0
      %224 = vmatprep.subr.mxu0 0.0
      %225 = vmatpush1.msra.mxu0 0.0
      %226 = vmatprep.subr.mxu0 0.0
      %227 = vmatpush1.msra.mxu0 0.0
      %228 = vmatprep.subr.mxu0 0.0
      %229 = vmatpush1.msra.mxu0 0.0
      %230 = vmatprep.subr.mxu0 0.0
      %231 = vmatpush1.msra.mxu0 0.0
      %232 = vmatprep.subr.mxu0 0.0
      %233 = vmatpush1.msra.mxu0 0.0
      %234 = vmatprep.subr.mxu0 0.0
      %235 = vmatpush1.msra.mxu0 0.0
      %236 = vmatprep.subr.mxu0 0.0
      %237 = vmatpush1.msra.mxu0 0.0
      %238 = vmatprep.subr.mxu0 0.0
      %239 = vmatpush1.msra.mxu0 0.0
      %240 = vmatprep.subr.mxu0 0.0
      %241 = vmatpush1.msra.mxu0 0.0
      %242 = vmatprep.subr.mxu0 0.0
      %243 = vmatpush1.msra.mxu0 0.0
      %244 = vmatprep.subr.mxu0 0.0
      %245 = vmatpush1.msra.mxu0 %v212
      %246 = vmatprep.subr.mxu0 0.0
      %247 = vmatpush1.msra.mxu0 %v211
      %248 = vmatprep.subr.mxu0 0.0
      %249 = vmatpush1.msra.mxu0 %v210
      %250 = vmatprep.subr.mxu0 0.0
      %251 = vmatpush1.msra.mxu0 %v209
      %252 = vmatprep.subr.mxu0 0.0
      %253 = vmatpush1.msra.mxu0 %v208
      %254 = vmatprep.subr.mxu0 0.0
      %255 = vmatpush1.msra.mxu0 %v207
      %256 = vmatprep.subr.mxu0 0.0
      %257 = vmatpush2.msra.mxu0 0.0
      %258 = vmatprep.subr.mxu0 0.0
      %259 = vmatpush2.msra.mxu0 0.0
      %260 = vmatprep.subr.mxu0 0.0
      %261 = vmatpush2.msra.mxu0 0.0
      %262 = vmatprep.subr.mxu0 0.0
      %263 = vmatpush2.msra.mxu0 0.0
      %264 = vmatprep.subr.mxu0 0.0
      %265 = vmatpush2.msra.mxu0 0.0
      %266 = vmatprep.subr.mxu0 0.0
      %267 = vmatpush2.msra.mxu0 0.0
      %268 = vmatprep.subr.mxu0 0.0
      %269 = vmatpush2.msra.mxu0 0.0
      %270 = vmatprep.subr.mxu0 0.0
      %271 = vmatpush2.msra.mxu0 0.0
      %272 = vmatprep.subr.mxu0 0.0
      %273 = vmatpush2.msra.mxu0 0.0
      %274 = vmatprep.subr.mxu0 0.0
      %275 = vmatpush2.msra.mxu0 0.0
      %276 = vmatprep.subr.mxu0 0.0
      %277 = vmatpush2.msra.mxu0 0.0
      %278 = vmatprep.subr.mxu0 0.0
      %279 = vmatpush2.msra.mxu0 0.0
      %280 = vmatprep.subr.mxu0 0.0
      %281 = vmatpush2.msra.mxu0 0.0
      %282 = vmatprep.subr.mxu0 0.0
      %283 = vmatpush2.msra.mxu0 0.0
      %284 = vmatprep.subr.mxu0 0.0
      %285 = vmatpush2.msra.mxu0 0.0
      %286 = vmatprep.subr.mxu0 0.0
      %287 = vmatpush2.msra.mxu0 0.0
      %288 = vmatprep.mubr.f32.mxu0 0.0
      %289 = vmatmul.mubr.f32.gmra.mxu0 %v222
      %v290 = vpop.f32.mrf.mxu0
      %v291 = vadd.f32 %v218, %v290
      %v292 = vpop.f32.mrf.mxu0
      %293 = vdwg.mxu0
      %v294 = vxor.u32 %v291, 2147483648
      %v295 = vmul.f32 %v294, 1.442695
      %v296 = vpow.pop %v295
      %v297 = vadd.f32 %v296, 1.0
      %v298 = vrcp.pop %v297
      %v299 = vmul.f32 1.0, %v298
      %v300 = vtanh.pop %v291
      %302 = vrot.lane.b32.xlu0 %v200, 32
      %v303 = vpop.permute.xlu0 %302
      %v305 = vmul.f32 %v299, %v303
      %307 = vrot.lane.b32.xlu0 %v300, 64
      %v308 = vpop.permute.xlu0 %307
      %v310 = vmul.f32 %v299, %v308
      %312 = vrot.lane.b32.xlu0 %v310, 32
      %v313 = vpop.permute.xlu0 %312
      %v315 = vadd.f32 %v305, %v313
      %v316 = vtanh.pop %v315
      %318 = vrot.lane.b32.xlu0 %v316, 64
      %v319 = vpop.permute.xlu0 %318
      %v321 = vmul.f32 %v299, %v319
      %323 = vrot.lane.b32.xlu0 %v321, 32
      %v324 = vpop.permute.xlu0 %323
      %vm326 = vcmask 261120
      %327 = vst.msk [vmem:[#allocation2] sm:$0xff] %vm326, %v324
      %329 = vrot.lane.b32.xlu0 %v315, 96
      %v330 = vpop.permute.xlu0 %329
      %332 = vst.msk [vmem:[#allocation3] sm:$0xff] %vm326, %v330
      %333 = vst.msk [vmem:[%s190] sm:$0xff] %vm326, %v324
      %334 = vst.msk [vmem:[%s4] sm:$0xff] %vm326, %v324
      %p335 = scmp.lt.s32.totalorder %s16, 7
      %s336 = scalar_select %p335, %s16, 7
      %s337 = smul.addr %s336, 8
      %s338 = scalar_lea.vmem %s3, %s337
      // Predicated region
      $region37: #{_forward.2} parent=31 // pred_check
        %p339 = pneg %p102
      $region38: #{_forward.2} parent=31 // pred_check_branch
        %341 = sbr.rel (%p339) target = $region40
      $region39: #{_forward.2} parent=31 // pred_region
        _
      $region40: #{_forward.2} parent=31 // pred_fallthru
        _
      // Predicated region
      $region41: #{_forward.2} parent=31 // pred_check
        %p342 = pneg %p123
      $region42: #{_forward.2} parent=31 // pred_check_branch
        %344 = sbr.rel (%p342) target = $region44
      $region43: #{_forward.2} parent=31 // pred_region
        _
      $region44: #{_forward.2} parent=31 // pred_fallthru
        _
      // Predicated region
      $region45: #{_forward.2} parent=31 // pred_check
        %p345 = pneg %p123
      $region46: #{_forward.2} parent=31 // pred_check_branch
        %347 = sbr.rel (%p345) target = $region48
      $region47: #{_forward.2} parent=31 // pred_region
        _
      $region48: #{_forward.2} parent=31 // pred_fallthru
        _
    $region32: #{_forward.2} parent=5 // pred_fallthru
      _
    %p348 = scmp.le.s32.totalorder 2, %s11
    // Predicated region
    $region49: #{_forward.2} parent=5 // pred_check
      %p349 = pneg %p348
    $region50: #{_forward.2} parent=5 // pred_check_branch
      %351 = sbr.rel (%p349) target = $region52
    $region51: #{_forward.2} parent=5 // pred_region
      %s352 = ssub.s32 %s11, 2
      // Predicated region
      $region53: #{_forward.2} parent=51 // pred_check
        %p353 = pneg %p108
      $region54: #{_forward.2} parent=51 // pred_check_branch
        %355 = sbr.rel (%p353) target = $region56
      $region55: #{_forward.2} parent=51 // pred_region
        %p356 = scmp.lt.s32.totalorder %s17, 7
        %s357 = scalar_select %p356, %s17, 7
        %s358 = smul.addr %s357, 8
        %s359 = scalar_lea.vmem %s3, %s358
      $region56: #{_forward.2} parent=51 // pred_fallthru
        _
    $region52: #{_forward.2} parent=5 // pred_fallthru
      _
  $region6: #{_forward.2} parent=0 // loop_footer
    %s15 = sadd.s32 1, %s11
  $region7: #{_forward.2} parent=0 // loop_footer_branch
    %10 = sbr.rel target = $region3
  $region8: #{_forward.2} parent=0 // loop_exit
    _

// kernel: _forward.3
$region0: #{_forward.3}
  #allocation0 [shape = 'u32[]', space=smem, size = 0x4, offset = 0x4, fixed_abs, tag = 'smem constant byte address 0x4 - core index']
  #allocation1 [shape = 'u32[144,128]{1,0:T(1,128)}', space=vmem, size = 0x12000, scoped, tag = 'internal scratch']
  #allocation2 [shape = 'f32[8,32]{1,0:T(8,128)}', space=vmem, size = 0x1000, scoped, tag = 'scratch operand']
  #allocation3 [shape = 'f32[8,16]{1,0:T(8,128)}', space=vmem, size = 0x1000, scoped, tag = 'scratch operand']
  %s0 = inlined_call_operand.vmem [shape: f32[8,8,1], index: 0, kind: input, shape index: {}]
  %s1 = inlined_call_operand.vmem [shape: f32[8,8,16], index: 1, kind: input, shape index: {}]
  %s2 = inlined_call_operand.vmem [shape: f32[8,32], index: 2, kind: input, shape index: {}]
  %s3 = inlined_call_operand.vmem [shape: f32[8,8,32], index: 3, kind: input, shape index: {}]
  %s4 = inlined_call_operand.vmem [shape: f32[8,8,32], index: 4, kind: input, shape index: {}]
  %s5 = inlined_call_operand.vmem [shape: f32[128,16], index: 5, kind: input, shape index: {}]
  %s6 = inlined_call_operand.vmem [shape: f32[32,32], index: 6, kind: input, shape index: {}]
  %s7 = inlined_call_operand.vmem [shape: f32[1,32], index: 7, kind: input, shape index: {}]
  %s8 = inlined_call_operand.vmem [shape: f32[48,96], index: 8, kind: input, shape index: {}]
  %s9 = inlined_call_operand.vmem [shape: f32[32,96], index: 9, kind: input, shape index: {}]
  %s10 = inlined_call_operand.vmem [shape: f32[1,96], index: 10, kind: input, shape index: {}]
  %s11 = inlined_call_operand.vmem [shape: f32[1,96], index: 11, kind: input, shape index: {}]
  %s12 = inlined_call_operand.vmem [shape: f32[80,128], index: 12, kind: input, shape index: {}]
  %s13 = inlined_call_operand.vmem [shape: f32[1,128], index: 13, kind: input, shape index: {}]
  %s14 = inlined_call_operand.vmem [shape: f32[7,8,128], index: 14, kind: output, shape index: {}]
  %s15 = sld [smem:[#allocation0]]
  $region93: #{_forward.3} parent=0
    _
  %s17 = ssub.s32 1, %s15
  %s18 = scalar_select 0, %s17, %s15
  loop: start=0, step=1, limit=9
  $region2: #{_forward.3} parent=0 // loop_pre_header
    _
  $region3: #{_forward.3} parent=0 // loop_header
    %s20 = sphi 0, %s24
    %p21 = scmp.ge.s32.totalorder %s20, 9
    %s28 = sphi 0, %s28
    %s30 = sphi 0, %s28
    %s31 = sphi 0, %s30
    %s45 = sphi 0, %s31
    %s49 = sphi 0, %s49
    %s51 = sphi 0, %s49
    %s52 = sphi 0, %s51
    %s66 = sphi 0, %s52
    %s70 = sphi 0, %s70
    %s72 = sphi 0, %s70
    %s73 = sphi 0, %s72
    %s87 = sphi 0, %s73
    %s91 = sphi 0, %s91
    %s93 = sphi 0, %s91
    %s94 = sphi 0, %s93
    %s108 = sphi 0, %s94
    %s112 = sphi 0, %s112
    %s114 = sphi 0, %s112
    %s115 = sphi 0, %s114
    %s129 = sphi 0, %s115
    %s133 = sphi 0, %s133
    %s135 = sphi 0, %s133
    %s136 = sphi 0, %s135
    %s150 = sphi 0, %s136
    %s154 = sphi 0, %s154
    %s156 = sphi 0, %s154
    %s157 = sphi 0, %s156
    %s171 = sphi 0, %s157
    %s175 = sphi 0, %s175
    %s177 = sphi 0, %s175
    %s178 = sphi 0, %s177
    %s192 = sphi 0, %s178
    %s196 = sphi 0, %s196
    %s198 = sphi 0, %s196
    %s199 = sphi 0, %s198
    %s213 = sphi 0, %s199
    %s217 = sphi 0, %s217
    %s219 = sphi 0, %s217
    %s220 = sphi 0, %s219
    %s234 = sphi 0, %s220
    %s238 = sphi 0, %s238
    %s240 = sphi 0, %s238
    %s241 = sphi 0, %s240
    %s255 = sphi 0, %s241
    %s259 = sphi 0, %s259
    %s261 = sphi 0, %s259
    %s262 = sphi 0, %s261
    %s276 = sphi 0, %s262
    %s280 = sphi 0, %s280
    %s282 = sphi 0, %s280
    %s283 = sphi 0, %s282
    %s297 = sphi 0, %s283
    %s301 = sphi 0, %s301
    %s303 = sphi 0, %s301
    %s304 = sphi 0, %s303
    %s318 = sphi 0, %s304
    %s324 = sphi 0, %s326
    %s327 = sphi 0, %s324
    %s328 = sphi 0, %s327
    %s344 = sphi 0, %s328
  $region4: #{_forward.3} parent=0 // loop_header_branch
    %23 = sbr.rel (%p21) target = $region8
  $region5: #{_forward.3} parent=0 // loop_body
    %s25 = ssub.s32 %s20, 1
    %s26 = ssub.s32 %s20, 2
    %s27 = sadd.s32 %s20, 1
    %s29 = sadd.s32 %s28, 1
    %p32 = scmp.eq.s32.totalorder %s20, 6
    %p33 = scmp.ne.s32.totalorder %s28, %s30
    %p34 = scmp.eq.s32.totalorder %s20, 0
    %p35 = por %p33, %p34
    %p36 = scmp.ne.s32.totalorder %s28, %s30
    %p37 = scmp.eq.s32.totalorder %s25, 6
    %p38 = por %p36, %p37
    %p39 = scmp.ne.s32.totalorder %s30, %s31
    %p40 = scmp.eq.s32.totalorder %s25, 0
    %p41 = por %p39, %p40
    %p42 = scmp.ne.s32.totalorder %s30, %s31
    %p43 = scmp.eq.s32.totalorder %s26, 6
    %p44 = por %p42, %p43
    %p46 = scmp.ne.s32.totalorder %s31, %s45
    %p47 = scmp.eq.s32.totalorder %s26, 0
    %p48 = por %p46, %p47
    %s50 = sadd.s32 %s49, 1
    %p53 = scmp.eq.s32.totalorder %s20, 6
    %p54 = scmp.ne.s32.totalorder %s49, %s51
    %p55 = scmp.eq.s32.totalorder %s20, 0
    %p56 = por %p54, %p55
    %p57 = scmp.ne.s32.totalorder %s49, %s51
    %p58 = scmp.eq.s32.totalorder %s25, 6
    %p59 = por %p57, %p58
    %p60 = scmp.ne.s32.totalorder %s51, %s52
    %p61 = scmp.eq.s32.totalorder %s25, 0
    %p62 = por %p60, %p61
    %p63 = scmp.ne.s32.totalorder %s51, %s52
    %p64 = scmp.eq.s32.totalorder %s26, 6
    %p65 = por %p63, %p64
    %p67 = scmp.ne.s32.totalorder %s52, %s66
    %p68 = scmp.eq.s32.totalorder %s26, 0
    %p69 = por %p67, %p68
    %s71 = sadd.s32 %s70, 1
    %p74 = scmp.eq.s32.totalorder %s20, 6
    %p75 = scmp.ne.s32.totalorder %s70, %s72
    %p76 = scmp.eq.s32.totalorder %s20, 0
    %p77 = por %p75, %p76
    %p78 = scmp.ne.s32.totalorder %s70, %s72
    %p79 = scmp.eq.s32.totalorder %s25, 6
    %p80 = por %p78, %p79
    %p81 = scmp.ne.s32.totalorder %s72, %s73
    %p82 = scmp.eq.s32.totalorder %s25, 0
    %p83 = por %p81, %p82
    %p84 = scmp.ne.s32.totalorder %s72, %s73
    %p85 = scmp.eq.s32.totalorder %s26, 6
    %p86 = por %p84, %p85
    %p88 = scmp.ne.s32.totalorder %s73, %s87
    %p89 = scmp.eq.s32.totalorder %s26, 0
    %p90 = por %p88, %p89
    %s92 = sadd.s32 %s91, 1
    %p95 = scmp.eq.s32.totalorder %s20, 6
    %p96 = scmp.ne.s32.totalorder %s91, %s93
    %p97 = scmp.eq.s32.totalorder %s20, 0
    %p98 = por %p96, %p97
    %p99 = scmp.ne.s32.totalorder %s91, %s93
    %p100 = scmp.eq.s32.totalorder %s25, 6
    %p101 = por %p99, %p100
    %p102 = scmp.ne.s32.totalorder %s93, %s94
    %p103 = scmp.eq.s32.totalorder %s25, 0
    %p104 = por %p102, %p103
    %p105 = scmp.ne.s32.totalorder %s93, %s94
    %p106 = scmp.eq.s32.totalorder %s26, 6
    %p107 = por %p105, %p106
    %p109 = scmp.ne.s32.totalorder %s94, %s108
    %p110 = scmp.eq.s32.totalorder %s26, 0
    %p111 = por %p109, %p110
    %s113 = sadd.s32 %s112, 1
    %p116 = scmp.eq.s32.totalorder %s20, 6
    %p117 = scmp.ne.s32.totalorder %s112, %s114
    %p118 = scmp.eq.s32.totalorder %s20, 0
    %p119 = por %p117, %p118
    %p120 = scmp.ne.s32.totalorder %s112, %s114
    %p121 = scmp.eq.s32.totalorder %s25, 6
    %p122 = por %p120, %p121
    %p123 = scmp.ne.s32.totalorder %s114, %s115
    %p124 = scmp.eq.s32.totalorder %s25, 0
    %p125 = por %p123, %p124
    %p126 = scmp.ne.s32.totalorder %s114, %s115
    %p127 = scmp.eq.s32.totalorder %s26, 6
    %p128 = por %p126, %p127
    %p130 = scmp.ne.s32.totalorder %s115, %s129
    %p131 = scmp.eq.s32.totalorder %s26, 0
    %p132 = por %p130, %p131
    %s134 = sadd.s32 %s133, 1
    %p137 = scmp.eq.s32.totalorder %s20, 6
    %p138 = scmp.ne.s32.totalorder %s133, %s135
    %p139 = scmp.eq.s32.totalorder %s20, 0
    %p140 = por %p138, %p139
    %p141 = scmp.ne.s32.totalorder %s133, %s135
    %p142 = scmp.eq.s32.totalorder %s25, 6
    %p143 = por %p141, %p142
    %p144 = scmp.ne.s32.totalorder %s135, %s136
    %p145 = scmp.eq.s32.totalorder %s25, 0
    %p146 = por %p144, %p145
    %p147 = scmp.ne.s32.totalorder %s135, %s136
    %p148 = scmp.eq.s32.totalorder %s26, 6
    %p149 = por %p147, %p148
    %p151 = scmp.ne.s32.totalorder %s136, %s150
    %p152 = scmp.eq.s32.totalorder %s26, 0
    %p153 = por %p151, %p152
    %s155 = sadd.s32 %s154, 1
    %p158 = scmp.eq.s32.totalorder %s20, 6
    %p159 = scmp.ne.s32.totalorder %s154, %s156
    %p160 = scmp.eq.s32.totalorder %s20, 0
    %p161 = por %p159, %p160
    %p162 = scmp.ne.s32.totalorder %s154, %s156
    %p163 = scmp.eq.s32.totalorder %s25, 6
    %p164 = por %p162, %p163
    %p165 = scmp.ne.s32.totalorder %s156, %s157
    %p166 = scmp.eq.s32.totalorder %s25, 0
    %p167 = por %p165, %p166
    %p168 = scmp.ne.s32.totalorder %s156, %s157
    %p169 = scmp.eq.s32.totalorder %s26, 6
    %p170 = por %p168, %p169
    %p172 = scmp.ne.s32.totalorder %s157, %s171
    %p173 = scmp.eq.s32.totalorder %s26, 0
    %p174 = por %p172, %p173
    %s176 = sadd.s32 %s175, 1
    %p179 = scmp.eq.s32.totalorder %s20, 6
    %p180 = scmp.ne.s32.totalorder %s175, %s177
    %p181 = scmp.eq.s32.totalorder %s20, 0
    %p182 = por %p180, %p181
    %p183 = scmp.ne.s32.totalorder %s175, %s177
    %p184 = scmp.eq.s32.totalorder %s25, 6
    %p185 = por %p183, %p184
    %p186 = scmp.ne.s32.totalorder %s177, %s178
    %p187 = scmp.eq.s32.totalorder %s25, 0
    %p188 = por %p186, %p187
    %p189 = scmp.ne.s32.totalorder %s177, %s178
    %p190 = scmp.eq.s32.totalorder %s26, 6
    %p191 = por %p189, %p190
    %p193 = scmp.ne.s32.totalorder %s178, %s192
    %p194 = scmp.eq.s32.totalorder %s26, 0
    %p195 = por %p193, %p194
    %s197 = sadd.s32 %s196, 1
    %p200 = scmp.eq.s32.totalorder %s20, 6
    %p201 = scmp.ne.s32.totalorder %s196, %s198
    %p202 = scmp.eq.s32.totalorder %s20, 0
    %p203 = por %p201, %p202
    %p204 = scmp.ne.s32.totalorder %s196, %s198
    %p205 = scmp.eq.s32.totalorder %s25, 6
    %p206 = por %p204, %p205
    %p207 = scmp.ne.s32.totalorder %s198, %s199
    %p208 = scmp.eq.s32.totalorder %s25, 0
    %p209 = por %p207, %p208
    %p210 = scmp.ne.s32.totalorder %s198, %s199
    %p211 = scmp.eq.s32.totalorder %s26, 6
    %p212 = por %p210, %p211
    %p214 = scmp.ne.s32.totalorder %s199, %s213
    %p215 = scmp.eq.s32.totalorder %s26, 0
    %p216 = por %p214, %p215
    %s218 = sadd.s32 %s217, 1
    %p221 = scmp.eq.s32.totalorder %s20, 6
    %p222 = scmp.ne.s32.totalorder %s217, %s219
    %p223 = scmp.eq.s32.totalorder %s20, 0
    %p224 = por %p222, %p223
    %p225 = scmp.ne.s32.totalorder %s217, %s219
    %p226 = scmp.eq.s32.totalorder %s25, 6
    %p227 = por %p225, %p226
    %p228 = scmp.ne.s32.totalorder %s219, %s220
    %p229 = scmp.eq.s32.totalorder %s25, 0
    %p230 = por %p228, %p229
    %p231 = scmp.ne.s32.totalorder %s219, %s220
    %p232 = scmp.eq.s32.totalorder %s26, 6
    %p233 = por %p231, %p232
    %p235 = scmp.ne.s32.totalorder %s220, %s234
    %p236 = scmp.eq.s32.totalorder %s26, 0
    %p237 = por %p235, %p236
    %s239 = sadd.s32 %s238, 1
    %p242 = scmp.eq.s32.totalorder %s20, 6
    %p243 = scmp.ne.s32.totalorder %s238, %s240
    %p244 = scmp.eq.s32.totalorder %s20, 0
    %p245 = por %p243, %p244
    %p246 = scmp.ne.s32.totalorder %s238, %s240
    %p247 = scmp.eq.s32.totalorder %s25, 6
    %p248 = por %p246, %p247
    %p249 = scmp.ne.s32.totalorder %s240, %s241
    %p250 = scmp.eq.s32.totalorder %s25, 0
    %p251 = por %p249, %p250
    %p252 = scmp.ne.s32.totalorder %s240, %s241
    %p253 = scmp.eq.s32.totalorder %s26, 6
    %p254 = por %p252, %p253
    %p256 = scmp.ne.s32.totalorder %s241, %s255
    %p257 = scmp.eq.s32.totalorder %s26, 0
    %p258 = por %p256, %p257
    %s260 = sadd.s32 %s259, 1
    %p263 = scmp.eq.s32.totalorder %s20, 6
    %p264 = scmp.ne.s32.totalorder %s259, %s261
    %p265 = scmp.eq.s32.totalorder %s20, 0
    %p266 = por %p264, %p265
    %p267 = scmp.ne.s32.totalorder %s259, %s261
    %p268 = scmp.eq.s32.totalorder %s25, 6
    %p269 = por %p267, %p268
    %p270 = scmp.ne.s32.totalorder %s261, %s262
    %p271 = scmp.eq.s32.totalorder %s25, 0
    %p272 = por %p270, %p271
    %p273 = scmp.ne.s32.totalorder %s261, %s262
    %p274 = scmp.eq.s32.totalorder %s26, 6
    %p275 = por %p273, %p274
    %p277 = scmp.ne.s32.totalorder %s262, %s276
    %p278 = scmp.eq.s32.totalorder %s26, 0
    %p279 = por %p277, %p278
    %s281 = sadd.s32 %s280, 1
    %p284 = scmp.eq.s32.totalorder %s20, 6
    %p285 = scmp.ne.s32.totalorder %s280, %s282
    %p286 = scmp.eq.s32.totalorder %s20, 0
    %p287 = por %p285, %p286
    %p288 = scmp.ne.s32.totalorder %s280, %s282
    %p289 = scmp.eq.s32.totalorder %s25, 6
    %p290 = por %p288, %p289
    %p291 = scmp.ne.s32.totalorder %s282, %s283
    %p292 = scmp.eq.s32.totalorder %s25, 0
    %p293 = por %p291, %p292
    %p294 = scmp.ne.s32.totalorder %s282, %s283
    %p295 = scmp.eq.s32.totalorder %s26, 6
    %p296 = por %p294, %p295
    %p298 = scmp.ne.s32.totalorder %s283, %s297
    %p299 = scmp.eq.s32.totalorder %s26, 0
    %p300 = por %p298, %p299
    %s302 = sadd.s32 %s301, 1
    %p305 = scmp.eq.s32.totalorder %s20, 6
    %p306 = scmp.ne.s32.totalorder %s301, %s303
    %p307 = scmp.eq.s32.totalorder %s20, 0
    %p308 = por %p306, %p307
    %p309 = scmp.ne.s32.totalorder %s301, %s303
    %p310 = scmp.eq.s32.totalorder %s25, 6
    %p311 = por %p309, %p310
    %p312 = scmp.ne.s32.totalorder %s303, %s304
    %p313 = scmp.eq.s32.totalorder %s25, 0
    %p314 = por %p312, %p313
    %p315 = scmp.ne.s32.totalorder %s303, %s304
    %p316 = scmp.eq.s32.totalorder %s26, 6
    %p317 = por %p315, %p316
    %p319 = scmp.ne.s32.totalorder %s304, %s318
    %p320 = scmp.eq.s32.totalorder %s26, 0
    %p321 = por %p319, %p320
    %s322 = ssub.s32 %s20, %s27
    %p323 = scmp.eq.s32.totalorder %s322, 0
    %s325 = sadd.s32 %s324, 1
    %s326 = scalar_select %p323, %s324, %s325
    %p329 = pneg %p323
    %p330 = scmp.eq.s32.totalorder %s20, 6
    %p331 = por %p329, %p330
    %p332 = scmp.ne.s32.totalorder %s324, %s327
    %p333 = scmp.eq.s32.totalorder %s20, 0
    %p334 = por %p332, %p333
    %p335 = scmp.ne.s32.totalorder %s324, %s327
    %p336 = scmp.eq.s32.totalorder %s25, 6
    %p337 = por %p335, %p336
    %p338 = scmp.ne.s32.totalorder %s327, %s328
    %p339 = scmp.eq.s32.totalorder %s25, 0
    %p340 = por %p338, %p339
    %p341 = scmp.ne.s32.totalorder %s327, %s328
    %p342 = scmp.eq.s32.totalorder %s26, 6
    %p343 = por %p341, %p342
    %p345 = scmp.ne.s32.totalorder %s328, %s344
    %p346 = scmp.eq.s32.totalorder %s26, 0
    %p347 = por %p345, %p346
    %p348 = scmp.le.s32.totalorder 1, %s20
    %p349 = scmp.lt.s32.totalorder %s20, 8
    %p350 = pnand %p348, %p349
    %p351 = pneg %p350
    // Predicated region
    $region9: #{_forward.3} parent=5 // pred_check
      _
    $region10: #{_forward.3} parent=5 // pred_check_branch
      %353 = sbr.rel (%p350) target = $region12
    $region11: #{_forward.3} parent=5 // pred_region
      %s354 = ssub.s32 %s20, 1
      // Predicated region
      $region13: #{_forward.3} parent=11 // pred_check
        %p355 = pneg %p41
      $region14: #{_forward.3} parent=11 // pred_check_branch
        %357 = sbr.rel (%p355) target = $region16
      $region15: #{_forward.3} parent=11 // pred_region
        _
      $region16: #{_forward.3} parent=11 // pred_fallthru
        _
      // Predicated region
      $region17: #{_forward.3} parent=11 // pred_check
        %p358 = pneg %p62
      $region18: #{_forward.3} parent=11 // pred_check_branch
        %360 = sbr.rel (%p358) target = $region20
      $region19: #{_forward.3} parent=11 // pred_region
        _
      $region20: #{_forward.3} parent=11 // pred_fallthru
        _
      // Predicated region
      $region21: #{_forward.3} parent=11 // pred_check
        %p361 = pneg %p83
      $region22: #{_forward.3} parent=11 // pred_check_branch
        %363 = sbr.rel (%p361) target = $region24
      $region23: #{_forward.3} parent=11 // pred_region
        _
      $region24: #{_forward.3} parent=11 // pred_fallthru
        _
      // Predicated region
      $region25: #{_forward.3} parent=11 // pred_check
        %p364 = pneg %p104
      $region26: #{_forward.3} parent=11 // pred_check_branch
        %366 = sbr.rel (%p364) target = $region28
      $region27: #{_forward.3} parent=11 // pred_region
        _
      $region28: #{_forward.3} parent=11 // pred_fallthru
        _
      // Predicated region
      $region29: #{_forward.3} parent=11 // pred_check
        %p367 = pneg %p125
      $region30: #{_forward.3} parent=11 // pred_check_branch
        %369 = sbr.rel (%p367) target = $region32
      $region31: #{_forward.3} parent=11 // pred_region
        _
      $region32: #{_forward.3} parent=11 // pred_fallthru
        _
      // Predicated region
      $region33: #{_forward.3} parent=11 // pred_check
        %p370 = pneg %p146
      $region34: #{_forward.3} parent=11 // pred_check_branch
        %372 = sbr.rel (%p370) target = $region36
      $region35: #{_forward.3} parent=11 // pred_region
        _
      $region36: #{_forward.3} parent=11 // pred_fallthru
        _
      // Predicated region
      $region37: #{_forward.3} parent=11 // pred_check
        %p373 = pneg %p167
      $region38: #{_forward.3} parent=11 // pred_check_branch
        %375 = sbr.rel (%p373) target = $region40
      $region39: #{_forward.3} parent=11 // pred_region
        _
      $region40: #{_forward.3} parent=11 // pred_fallthru
        _
      // Predicated region
      $region41: #{_forward.3} parent=11 // pred_check
        %p376 = pneg %p188
      $region42: #{_forward.3} parent=11 // pred_check_branch
        %378 = sbr.rel (%p376) target = $region44
      $region43: #{_forward.3} parent=11 // pred_region
        _
      $region44: #{_forward.3} parent=11 // pred_fallthru
        _
      // Predicated region
      $region45: #{_forward.3} parent=11 // pred_check
        %p379 = pneg %p209
      $region46: #{_forward.3} parent=11 // pred_check_branch
        %381 = sbr.rel (%p379) target = $region48
      $region47: #{_forward.3} parent=11 // pred_region
        _
      $region48: #{_forward.3} parent=11 // pred_fallthru
        _
      // Predicated region
      $region49: #{_forward.3} parent=11 // pred_check
        %p382 = pneg %p230
      $region50: #{_forward.3} parent=11 // pred_check_branch
        %384 = sbr.rel (%p382) target = $region52
      $region51: #{_forward.3} parent=11 // pred_region
        _
      $region52: #{_forward.3} parent=11 // pred_fallthru
        _
      // Predicated region
      $region53: #{_forward.3} parent=11 // pred_check
        %p385 = pneg %p251
      $region54: #{_forward.3} parent=11 // pred_check_branch
        %387 = sbr.rel (%p385) target = $region56
      $region55: #{_forward.3} parent=11 // pred_region
        _
      $region56: #{_forward.3} parent=11 // pred_fallthru
        _
      // Predicated region
      $region57: #{_forward.3} parent=11 // pred_check
        %p388 = pneg %p272
      $region58: #{_forward.3} parent=11 // pred_check_branch
        %390 = sbr.rel (%p388) target = $region60
      $region59: #{_forward.3} parent=11 // pred_region
        _
      $region60: #{_forward.3} parent=11 // pred_fallthru
        _
      // Predicated region
      $region61: #{_forward.3} parent=11 // pred_check
        %p391 = pneg %p293
      $region62: #{_forward.3} parent=11 // pred_check_branch
        %393 = sbr.rel (%p391) target = $region64
      $region63: #{_forward.3} parent=11 // pred_region
        _
      $region64: #{_forward.3} parent=11 // pred_fallthru
        _
      // Predicated region
      $region65: #{_forward.3} parent=11 // pred_check
        %p394 = pneg %p314
      $region66: #{_forward.3} parent=11 // pred_check_branch
        %396 = sbr.rel (%p394) target = $region68
      $region67: #{_forward.3} parent=11 // pred_region
        _
      $region68: #{_forward.3} parent=11 // pred_fallthru
        _
    $region12: #{_forward.3} parent=5 // pred_fallthru
      _
    %p397 = scmp.lt.s32.totalorder %s20, 7
    // Predicated region
    $region69: #{_forward.3} parent=5 // pred_check
      %p398 = pneg %p397
    $region70: #{_forward.3} parent=5 // pred_check_branch
      %400 = sbr.rel (%p398) target = $region72
    $region71: #{_forward.3} parent=5 // pred_region
      _
    $region72: #{_forward.3} parent=5 // pred_fallthru
      _
    %p401 = scmp.le.s32.totalorder 1, %s20
    %p402 = scmp.lt.s32.totalorder %s20, 8
    %p403 = pnand %p401, %p402
    %p404 = pneg %p403
    // Predicated region
    $region73: #{_forward.3} parent=5 // pred_check
      _
    $region74: #{_forward.3} parent=5 // pred_check_branch
      %406 = sbr.rel (%p403) target = $region76
    $region75: #{_forward.3} parent=5 // pred_region
      %s407 = ssub.s32 %s20, 1
      %p408 = pneg %p41
      %p409 = pneg %p38
      %p410 = pneg %p62
      %p411 = pneg %p59
      %p412 = pneg %p83
      %p413 = pneg %p80
      %p414 = pneg %p104
      %p415 = pneg %p101
      %p416 = pneg %p125
      %p417 = pneg %p122
      %p418 = pneg %p146
      %p419 = pneg %p143
      %p420 = pneg %p167
      %p421 = pneg %p164
      %p422 = pneg %p188
      %p423 = pneg %p185
      %p424 = pneg %p209
      %p425 = pneg %p206
      %p426 = pneg %p230
      %p427 = pneg %p227
      %p428 = pneg %p251
      %p429 = pneg %p248
      %p430 = pneg %p272
      %p431 = pneg %p269
      %p432 = pneg %p293
      %p433 = pneg %p290
      %p434 = pneg %p314
      %p435 = pneg %p311
      %p436 = pneg %p340
      %p437 = pneg %p337
      %p438 = scmp.lt.s32.totalorder %s25, 6
      %s439 = scalar_select %p438, %s25, 6
      %s440 = smul.addr %s439, 8
      %s441 = scalar_lea.vmem %s14, %s440
      %p442 = scmp.lt.s32.totalorder %s25, 6
      %s443 = scalar_select %p442, %s25, 6
      %s444 = smul.addr %s443, 8
      %s445 = scalar_lea.vmem %s14, %s444
      %p446 = scmp.eq.s32.totalorder %s25, 0
      // Predicated region
      $region77: #{_forward.3} parent=75 // pred_check
        %p447 = pneg %p446
      $region78: #{_forward.3} parent=75 // pred_check_branch
        %449 = sbr.rel (%p447) target = $region80
      $region79: #{_forward.3} parent=75 // pred_region
        %v450 = vld [vmem:[%s2] sm:$0xff]
        %vm451 = vcmask 261120
        %452 = vst.msk [vmem:[#allocation2] sm:$0xff] %vm451, %v450
        %v453 = vld [vmem:[%s1] sm:$0xff]
        %vm454 = vcmask 130048
        %455 = vst.msk [vmem:[#allocation3] sm:$0xff] %vm454, %v453
      $region80: #{_forward.3} parent=75 // pred_fallthru
        _
      %v456 = vld [vmem:[#allocation3] sm:$0xff]
      %v457 = vld [vmem:[#allocation2] sm:$0xff]
      %v458 = vld [vmem:[%s3] sm:$0xff]
      %v459 = vld [vmem:[%s3 + $0x8] sm:$0xff]
      %v460 = vld [vmem:[%s3 + $0x10] sm:$0xff]
      %v461 = vld [vmem:[%s3 + $0x18] sm:$0xff]
      %v462 = vld [vmem:[%s3 + $0x20] sm:$0xff]
      %v463 = vld [vmem:[%s3 + $0x28] sm:$0xff]
      %v464 = vld [vmem:[%s3 + $0x30] sm:$0xff]
      %v465 = vld [vmem:[%s3 + $0x38] sm:$0xff]
      %v466 = vld [vmem:[%s6] sm:$0xff]
      %v467 = vld [vmem:[%s6 + $0x8] sm:$0xff]
      %v468 = vld [vmem:[%s6 + $0x10] sm:$0xff]
      %v469 = vld [vmem:[%s6 + $0x18] sm:$0xff]
      %vm470 = vcmask 261120
      %v472 = vsel %vm470, %v457, 0
      %474 = vmatprep.subr.mxu0 0.0
      %475 = vmatpush1.msra.mxu0 0.0
      %476 = vmatprep.subr.mxu0 0.0
      %477 = vmatpush1.msra.mxu0 0.0
      %478 = vmatprep.subr.mxu0 0.0
      %479 = vmatpush1.msra.mxu0 0.0
      %480 = vmatprep.subr.mxu0 0.0
      %481 = vmatpush1.msra.mxu0 0.0
      %482 = vmatprep.subr.mxu0 0.0
      %483 = vmatpush1.msra.mxu0 0.0
      %484 = vmatprep.subr.mxu0 0.0
      %485 = vmatpush1.msra.mxu0 0.0
      %486 = vmatprep.subr.mxu0 0.0
      %487 = vmatpush1.msra.mxu0 0.0
      %488 = vmatprep.subr.mxu0 0.0
      %489 = vmatpush1.msra.mxu0 0.0
      %490 = vmatprep.subr.mxu0 0.0
      %491 = vmatpush1.msra.mxu0 0.0
      %492 = vmatprep.subr.mxu0 0.0
      %493 = vmatpush1.msra.mxu0 0.0
      %494 = vmatprep.subr.mxu0 0.0
      %495 = vmatpush1.msra.mxu0 0.0
      %496 = vmatprep.subr.mxu0 0.0
      %497 = vmatpush1.msra.mxu0 0.0
      %498 = vmatprep.subr.mxu0 0.0
      %499 = vmatpush1.msra.mxu0 %v469
      %500 = vmatprep.subr.mxu0 0.0
      %501 = vmatpush1.msra.mxu0 %v468
      %502 = vmatprep.subr.mxu0 0.0
      %503 = vmatpush1.msra.mxu0 %v467
      %504 = vmatprep.subr.mxu0 0.0
      %505 = vmatpush1.msra.mxu0 %v466
      %506 = vmatprep.subr.mxu0 0.0
      %507 = vmatpush2.msra.mxu0 0.0
      %508 = vmatprep.subr.mxu0 0.0
      %509 = vmatpush2.msra.mxu0 0.0
      %510 = vmatprep.subr.mxu0 0.0
      %511 = vmatpush2.msra.mxu0 0.0
      %512 = vmatprep.subr.mxu0 0.0
      %513 = vmatpush2.msra.mxu0 0.0
      %514 = vmatprep.subr.mxu0 0.0
      %515 = vmatpush2.msra.mxu0 0.0
      %516 = vmatprep.subr.mxu0 0.0
      %517 = vmatpush2.msra.mxu0 0.0
      %518 = vmatprep.subr.mxu0 0.0
      %519 = vmatpush2.msra.mxu0 0.0
      %520 = vmatprep.subr.mxu0 0.0
      %521 = vmatpush2.msra.mxu0 0.0
      %522 = vmatprep.subr.mxu0 0.0
      %523 = vmatpush2.msra.mxu0 0.0
      %524 = vmatprep.subr.mxu0 0.0
      %525 = vmatpush2.msra.mxu0 0.0
      %526 = vmatprep.subr.mxu0 0.0
      %527 = vmatpush2.msra.mxu0 0.0
      %528 = vmatprep.subr.mxu0 0.0
      %529 = vmatpush2.msra.mxu0 0.0
      %530 = vmatprep.subr.mxu0 0.0
      %531 = vmatpush2.msra.mxu0 0.0
      %532 = vmatprep.subr.mxu0 0.0
      %533 = vmatpush2.msra.mxu0 0.0
      %534 = vmatprep.subr.mxu0 0.0
      %535 = vmatpush2.msra.mxu0 0.0
      %536 = vmatprep.subr.mxu0 0.0
      %537 = vmatpush2.msra.mxu0 0.0
      %538 = vmatprep.mubr.f32.mxu0 0.0
      %539 = vmatmul.mubr.f32.gmra.mxu0 %v472
      %v540 = vpop.f32.mrf.mxu0
      %v541 = vadd.f32 0.0, %v540
      %v542 = vpop.f32.mrf.mxu0
      %543 = vdwg.mxu0
      %v544 = vld [vmem:[%s4] sm:$0xff]
      %v545 = vld [vmem:[%s4 + $0x8] sm:$0xff]
      %v546 = vld [vmem:[%s4 + $0x10] sm:$0xff]
      %v547 = vld [vmem:[%s4 + $0x18] sm:$0xff]
      %v548 = vld [vmem:[%s4 + $0x20] sm:$0xff]
      %v549 = vld [vmem:[%s4 + $0x28] sm:$0xff]
      %v550 = vld [vmem:[%s4 + $0x30] sm:$0xff]
      %v551 = vld [vmem:[%s4 + $0x38] sm:$0xff]
      %v553 = vcombine.high %v541, %v541
      %v555 = vunpack.c.l.s4 1966171168
      %v556 = vunpack.c.0.s8 %v555
      %v557 = vlaneseq
      %v558 = vshrl.u32 %v557, 7
      %v559 = vsub.s32 %v556, %v558
      %v560 = vrot.slane %v541, %v559
      %v562 = vunpack.c.l.s4 1966171168
      %v563 = vunpack.c.0.s8 %v562
      %v564 = vlaneseq
      %v565 = vshrl.u32 %v564, 7
      %v566 = vsub.s32 %v563, %v565
      %v567 = vrot.slane %v553, %v566
      %v568 = vcombine.high %v560, %v560
      %v569 = vcombine.high %v567, %v567
      %v571 = vunpack.c.l.s4 1966171168
      %v572 = vunpack.c.0.s8 %v571
      %v573 = vlaneseq
      %v574 = vshrl.u32 %v573, 7
      %v575 = vsub.s32 %v572, %v574
      %v576 = vrot.slane %v560, %v575
      %v578 = vunpack.c.l.s4 1966171168
      %v579 = vunpack.c.0.s8 %v578
      %v580 = vlaneseq
      %v581 = vshrl.u32 %v580, 7
      %v582 = vsub.s32 %v579, %v581
      %v583 = vrot.slane %v567, %v582
      %v585 = vunpack.c.l.s4 1966171168
      %v586 = vunpack.c.0.s8 %v585
      %v587 = vlaneseq
      %v588 = vshrl.u32 %v587, 7
      %v589 = vsub.s32 %v586, %v588
      %v590 = vrot.slane %v568, %v589
      %v592 = vunpack.c.l.s4 1966171168
      %v593 = vunpack.c.0.s8 %v592
      %v594 = vlaneseq
      %v595 = vshrl.u32 %v594, 7
      %v596 = vsub.s32 %v593, %v595
      %v597 = vrot.slane %v569, %v596
      %v598 = vcombine.high %v576, %v576
      %v599 = vcombine.high %v583, %v583
      %v600 = vcombine.high %v590, %v590
      %v601 = vcombine.high %v597, %v597
      %v602 = vlaneseq
      %v603 = vshrl.u32 %v602, 7
      %v604 = vsub.s32 0, %v603
      %v605 = vrot.slane %v576, %v604
      %v606 = vlaneseq
      %v607 = vshrl.u32 %v606, 7
      %v608 = vsub.s32 0, %v607
      %v609 = vrot.slane %v590, %v608
      %v610 = vlaneseq
      %v611 = vshrl.u32 %v610, 7
      %v612 = vsub.s32 0, %v611
      %v613 = vrot.slane %v598, %v612
      %v614 = vlaneseq
      %v615 = vshrl.u32 %v614, 7
      %v616 = vsub.s32 0, %v615
      %v617 = vrot.slane %v600, %v616
      %v618 = vlaneseq
      %v619 = vshrl.u32 %v618, 7
      %v620 = vsub.s32 0, %v619
      %v621 = vrot.slane %v583, %v620
      %v622 = vlaneseq
      %v623 = vshrl.u32 %v622, 7
      %v624 = vsub.s32 0, %v623
      %v625 = vrot.slane %v597, %v624
      %v626 = vlaneseq
      %v627 = vshrl.u32 %v626, 7
      %v628 = vsub.s32 0, %v627
      %v629 = vrot.slane %v599, %v628
      %v630 = vlaneseq
      %v631 = vshrl.u32 %v630, 7
      %v632 = vsub.s32 0, %v631
      %v633 = vrot.slane %v601, %v632
      %v642 = vadd.f32 %v544, %v605
      %v643 = vadd.f32 %v545, %v609
      %v644 = vadd.f32 %v546, %v613
      %v645 = vadd.f32 %v547, %v617
      %v646 = vadd.f32 %v548, %v621
      %v647 = vadd.f32 %v549, %v625
      %v648 = vadd.f32 %v550, %v629
      %v649 = vadd.f32 %v551, %v633
      %v650 = vtanh.pop %v642
      %v651 = vtanh.pop %v643
      %v652 = vtanh.pop %v644
      %v653 = vtanh.pop %v645
      %v654 = vtanh.pop %v646
      %v655 = vtanh.pop %v647
      %v656 = vtanh.pop %v648
      %v657 = vtanh.pop %v649
      %v658 = vld [vmem:[%s7] sm:$0x1]
      %v660 = vlaneseq
      %v661 = vshrl.u32 %v660, 7
      %v662 = vsub.s32 0, %v661
      %v663 = vrot.slane %v658, %v662
      %v665 = vmul.f32 %v650, %v663
      %v666 = vmul.f32 %v651, %v663
      %v667 = vmul.f32 %v652, %v663
      %v668 = vmul.f32 %v653, %v663
      %v669 = vmul.f32 %v654, %v663
      %v670 = vmul.f32 %v655, %v663
      %v671 = vmul.f32 %v656, %v663
      %v672 = vmul.f32 %v657, %v663
      %v673 = vsel %vm470, %v665, 0.0
      %674 = vadd.xlane.f32.xlu0 %v673
      %v675 = vpop.xlane.xlu0 %674
      %v676 = vsel %vm470, %v666, 0.0
      %677 = vadd.xlane.f32.xlu0 %v676
      %v678 = vpop.xlane.xlu0 %677
      %v679 = vsel %vm470, %v667, 0.0
      %680 = vadd.xlane.f32.xlu0 %v679
      %v681 = vpop.xlane.xlu0 %680
      %v682 = vsel %vm470, %v668, 0.0
      %683 = vadd.xlane.f32.xlu0 %v682
      %v684 = vpop.xlane.xlu0 %683
      %v685 = vsel %vm470, %v669, 0.0
      %686 = vadd.xlane.f32.xlu0 %v685
      %v687 = vpop.xlane.xlu0 %686
      %v688 = vsel %vm470, %v670, 0.0
      %689 = vadd.xlane.f32.xlu0 %v688
      %v690 = vpop.xlane.xlu0 %689
      %v691 = vsel %vm470, %v671, 0.0
      %692 = vadd.xlane.f32.xlu0 %v691
      %v693 = vpop.xlane.xlu0 %692
      %v694 = vsel %vm470, %v672, 0.0
      %695 = vadd.xlane.f32.xlu0 %v694
      %v696 = vpop.xlane.xlu0 %695
      %v705 = vlaneseq
      %v706 = vand.u32 %v705, 127
      %v707 = vlaneseq
      %v708 = vshrl.u32 %v707, 7
      %v709 = vsub.s32 %v706, %v708
      %v710 = vrot.slane %v675, %v709
      %v711 = vlaneseq
      %v712 = vshrl.u32 %v711, 7
      %v713 = vsub.s32 %v706, %v712
      %v714 = vrot.slane %v678, %v713
      %v715 = vlaneseq
      %v716 = vshrl.u32 %v715, 7
      %v717 = vsub.s32 %v706, %v716
      %v718 = vrot.slane %v681, %v717
      %v719 = vlaneseq
      %v720 = vshrl.u32 %v719, 7
      %v721 = vsub.s32 %v706, %v720
      %v722 = vrot.slane %v684, %v721
      %v723 = vlaneseq
      %v724 = vshrl.u32 %v723, 7
      %v725 = vsub.s32 %v706, %v724
      %v726 = vrot.slane %v687, %v725
      %v727 = vlaneseq
      %v728 = vshrl.u32 %v727, 7
      %v729 = vsub.s32 %v706, %v728
      %v730 = vrot.slane %v690, %v729
      %v731 = vlaneseq
      %v732 = vshrl.u32 %v731, 7
      %v733 = vsub.s32 %v706, %v732
      %v734 = vrot.slane %v693, %v733
      %v735 = vlaneseq
      %v736 = vshrl.u32 %v735, 7
      %v737 = vsub.s32 %v706, %v736
      %v738 = vrot.slane %v696, %v737
      %vm739 = vcmask 1041409
      %v740 = vsel %vm739, %v714, %v710
      %vm741 = vcmask 1042434
      %v742 = vsel %vm741, %v718, %v740
      %vm743 = vcmask 1043459
      %v744 = vsel %vm743, %v722, %v742
      %vm745 = vcmask 1044484
      %v746 = vsel %vm745, %v726, %v744
      %vm747 = vcmask 1045509
      %v748 = vsel %vm747, %v730, %v746
      %vm749 = vcmask 1046534
      %v750 = vsel %vm749, %v734, %v748
      %vm751 = vcmask 1047559
      %v752 = vsel %vm751, %v738, %v750
      %vm754 = vcmask 64512
      %v755 = vsel %vm754, %v752, -inf
      %756 = vmax.xlane.f32.xlu0 %v755
      %v757 = vpop.xlane.xlu0 %756
      %v759 = vlaneseq
      %v760 = vshrl.u32 %v759, 7
      %v761 = vsub.s32 0, %v760
      %v762 = vrot.slane %v757, %v761
      %v763 = vlaneseq
      %v764 = vshrl.u32 %v763, 7
      %v765 = vsub.s32 1, %v764
      %v766 = vrot.slane %v757, %v765
      %v767 = vlaneseq
      %v768 = vshrl.u32 %v767, 7
      %v769 = vsub.s32 2, %v768
      %v770 = vrot.slane %v757, %v769
      %v771 = vlaneseq
      %v772 = vshrl.u32 %v771, 7
      %v773 = vsub.s32 3, %v772
      %v774 = vrot.slane %v757, %v773
      %v775 = vlaneseq
      %v776 = vshrl.u32 %v775, 7
      %v777 = vsub.s32 4, %v776
      %v778 = vrot.slane %v757, %v777
      %v779 = vlaneseq
      %v780 = vshrl.u32 %v779, 7
      %v781 = vsub.s32 5, %v780
      %v782 = vrot.slane %v757, %v781
      %v783 = vlaneseq
      %v784 = vshrl.u32 %v783, 7
      %v785 = vsub.s32 6, %v784
      %v786 = vrot.slane %v757, %v785
      %v787 = vlaneseq
      %v788 = vshrl.u32 %v787, 7
      %v789 = vsub.s32 7, %v788
      %v790 = vrot.slane %v757, %v789
      %v799 = vsub.f32 %v675, %v762
      %v800 = vsub.f32 %v678, %v766
      %v801 = vsub.f32 %v681, %v770
      %v802 = vsub.f32 %v684, %v774
      %v803 = vsub.f32 %v687, %v778
      %v804 = vsub.f32 %v690, %v782
      %v805 = vsub.f32 %v693, %v786
      %v806 = vsub.f32 %v696, %v790
      %v807 = vmul.f32 %v799, 1.442695
      %v808 = vpow.pop %v807
      %v809 = vmul.f32 %v800, 1.442695
      %v810 = vpow.pop %v809
      %v811 = vmul.f32 %v801, 1.442695
      %v812 = vpow.pop %v811
      %v813 = vmul.f32 %v802, 1.442695
      %v814 = vpow.pop %v813
      %v815 = vmul.f32 %v803, 1.442695
      %v816 = vpow.pop %v815
      %v817 = vmul.f32 %v804, 1.442695
      %v818 = vpow.pop %v817
      %v819 = vmul.f32 %v805, 1.442695
      %v820 = vpow.pop %v819
      %v821 = vmul.f32 %v806, 1.442695
      %v822 = vpow.pop %v821
      %831 = vset.pattern.permute.xlu0 0
      %832 = vperm.xlu0 %831, %v808
      %v833 = vpop.permute.xlu0 %832
      %834 = vset.pattern.permute.xlu0 0
      %835 = vperm.xlu0 %834, %v810
      %v836 = vpop.permute.xlu0 %835
      %837 = vset.pattern.permute.xlu0 0
      %838 = vperm.xlu0 %837, %v812
      %v839 = vpop.permute.xlu0 %838
      %840 = vset.pattern.permute.xlu0 0
      %841 = vperm.xlu0 %840, %v814
      %v842 = vpop.permute.xlu0 %841
      %843 = vset.pattern.permute.xlu0 0
      %844 = vperm.xlu0 %843, %v816
      %v845 = vpop.permute.xlu0 %844
      %846 = vset.pattern.permute.xlu0 0
      %847 = vperm.xlu0 %846, %v818
      %v848 = vpop.permute.xlu0 %847
      %849 = vset.pattern.permute.xlu0 0
      %850 = vperm.xlu0 %849, %v820
      %v851 = vpop.permute.xlu0 %850
      %852 = vset.pattern.permute.xlu0 0
      %853 = vperm.xlu0 %852, %v822
      %v854 = vpop.permute.xlu0 %853
      %v855 = vlaneseq
      %v856 = vshrl.u32 %v855, 7
      %v857 = vsub.s32 %v706, %v856
      %v858 = vrot.slane %v833, %v857
      %v859 = vlaneseq
      %v860 = vshrl.u32 %v859, 7
      %v861 = vsub.s32 %v706, %v860
      %v862 = vrot.slane %v836, %v861
      %v863 = vlaneseq
      %v864 = vshrl.u32 %v863, 7
      %v865 = vsub.s32 %v706, %v864
      %v866 = vrot.slane %v839, %v865
      %v867 = vlaneseq
      %v868 = vshrl.u32 %v867, 7
      %v869 = vsub.s32 %v706, %v868
      %v870 = vrot.slane %v842, %v869
      %v871 = vlaneseq
      %v872 = vshrl.u32 %v871, 7
      %v873 = vsub.s32 %v706, %v872
      %v874 = vrot.slane %v845, %v873
      %v875 = vlaneseq
      %v876 = vshrl.u32 %v875, 7
      %v877 = vsub.s32 %v706, %v876
      %v878 = vrot.slane %v848, %v877
      %v879 = vlaneseq
      %v880 = vshrl.u32 %v879, 7
      %v881 = vsub.s32 %v706, %v880
      %v882 = vrot.slane %v851, %v881
      %v883 = vlaneseq
      %v884 = vshrl.u32 %v883, 7
      %v885 = vsub.s32 %v706, %v884
      %v886 = vrot.slane %v854, %v885
      %v887 = vsel %vm739, %v862, %v858
      %v888 = vsel %vm741, %v866, %v887
      %v889 = vsel %vm743, %v870, %v888
      %v890 = vsel %vm745, %v874, %v889
      %v891 = vsel %vm747, %v878, %v890
      %v892 = vsel %vm749, %v882, %v891
      %v893 = vsel %vm751, %v886, %v892
      %v895 = vsel %vm754, %v893, 0.0
      %896 = vadd.xlane.f32.xlu0 %v895
      %v897 = vpop.xlane.xlu0 %896
      %v899 = vlaneseq
      %v900 = vshrl.u32 %v899, 7
      %v901 = vsub.s32 0, %v900
      %v902 = vrot.slane %v897, %v901
      %v903 = vlaneseq
      %v904 = vshrl.u32 %v903, 7
      %v905 = vsub.s32 1, %v904
      %v906 = vrot.slane %v897, %v905
      %v907 = vlaneseq
      %v908 = vshrl.u32 %v907, 7
      %v909 = vsub.s32 2, %v908
      %v910 = vrot.slane %v897, %v909
      %v911 = vlaneseq
      %v912 = vshrl.u32 %v911, 7
      %v913 = vsub.s32 3, %v912
      %v914 = vrot.slane %v897, %v913
      %v915 = vlaneseq
      %v916 = vshrl.u32 %v915, 7
      %v917 = vsub.s32 4, %v916
      %v918 = vrot.slane %v897, %v917
      %v919 = vlaneseq
      %v920 = vshrl.u32 %v919, 7
      %v921 = vsub.s32 5, %v920
      %v922 = vrot.slane %v897, %v921
      %v923 = vlaneseq
      %v924 = vshrl.u32 %v923, 7
      %v925 = vsub.s32 6, %v924
      %v926 = vrot.slane %v897, %v925
      %v927 = vlaneseq
      %v928 = vshrl.u32 %v927, 7
      %v929 = vsub.s32 7, %v928
      %v930 = vrot.slane %v897, %v929
      %v939 = vrcp.pop %v902
      %v940 = vmul.f32 %v808, %v939
      %v941 = vrcp.pop %v906
      %v942 = vmul.f32 %v810, %v941
      %v943 = vrcp.pop %v910
      %v944 = vmul.f32 %v812, %v943
      %v945 = vrcp.pop %v914
      %v946 = vmul.f32 %v814, %v945
      %v947 = vrcp.pop %v918
      %v948 = vmul.f32 %v816, %v947
      %v949 = vrcp.pop %v922
      %v950 = vmul.f32 %v818, %v949
      %v951 = vrcp.pop %v926
      %v952 = vmul.f32 %v820, %v951
      %v953 = vrcp.pop %v930
      %v954 = vmul.f32 %v822, %v953
      %956 = vset.pattern.permute.xlu0 0
      %957 = vperm.xlu0 %956, %v940
      %v958 = vpop.permute.xlu0 %957
      %v959 = vlaneseq
      %v960 = vshrl.u32 %v959, 7
      %v961 = vsub.s32 %v706, %v960
      %v962 = vrot.slane %v958, %v961
      %v963 = vsel %vm754, %v962, 0
      %965 = vmatprep.subr.mxu0 0.0
      %966 = vmatpush1.msra.mxu0 0.0
      %967 = vmatprep.subr.mxu0 0.0
      %968 = vmatpush1.msra.mxu0 0.0
      %969 = vmatprep.subr.mxu0 0.0
      %970 = vmatpush1.msra.mxu0 0.0
      %971 = vmatprep.subr.mxu0 0.0
      %972 = vmatpush1.msra.mxu0 0.0
      %973 = vmatprep.subr.mxu0 0.0
      %974 = vmatpush1.msra.mxu0 0.0
      %975 = vmatprep.subr.mxu0 0.0
      %976 = vmatpush1.msra.mxu0 0.0
      %977 = vmatprep.subr.mxu0 0.0
      %978 = vmatpush1.msra.mxu0 0.0
      %979 = vmatprep.subr.mxu0 0.0
      %980 = vmatpush1.msra.mxu0 0.0
      %981 = vmatprep.subr.mxu0 0.0
      %982 = vmatpush1.msra.mxu0 0.0
      %983 = vmatprep.subr.mxu0 0.0
      %984 = vmatpush1.msra.mxu0 0.0
      %985 = vmatprep.subr.mxu0 0.0
      %986 = vmatpush1.msra.mxu0 0.0
      %987 = vmatprep.subr.mxu0 0.0
      %988 = vmatpush1.msra.mxu0 0.0
      %989 = vmatprep.subr.mxu0 0.0
      %990 = vmatpush1.msra.mxu0 0.0
      %991 = vmatprep.subr.mxu0 0.0
      %992 = vmatpush1.msra.mxu0 0.0
      %993 = vmatprep.subr.mxu0 0.0
      %994 = vmatpush1.msra.mxu0 0.0
      %995 = vmatprep.subr.mxu0 0.0
      %996 = vmatpush1.msra.mxu0 %v458
      %997 = vmatprep.subr.mxu0 0.0
      %998 = vmatpush2.msra.mxu0 0.0
      %999 = vmatprep.subr.mxu0 0.0
      %1000 = vmatpush2.msra.mxu0 0.0
      %1001 = vmatprep.subr.mxu0 0.0
      %1002 = vmatpush2.msra.mxu0 0.0
      %1003 = vmatprep.subr.mxu0 0.0
      %1004 = vmatpush2.msra.mxu0 0.0
      %1005 = vmatprep.subr.mxu0 0.0
      %1006 = vmatpush2.msra.mxu0 0.0
      %1007 = vmatprep.subr.mxu0 0.0
      %1008 = vmatpush2.msra.mxu0 0.0
      %1009 = vmatprep.subr.mxu0 0.0
      %1010 = vmatpush2.msra.mxu0 0.0
      %1011 = vmatprep.subr.mxu0 0.0
      %1012 = vmatpush2.msra.mxu0 0.0
      %1013 = vmatprep.subr.mxu0 0.0
      %1014 = vmatpush2.msra.mxu0 0.0
      %1015 = vmatprep.subr.mxu0 0.0
      %1016 = vmatpush2.msra.mxu0 0.0
      %1017 = vmatprep.subr.mxu0 0.0
      %1018 = vmatpush2.msra.mxu0 0.0
      %1019 = vmatprep.subr.mxu0 0.0
      %1020 = vmatpush2.msra.mxu0 0.0
      %1021 = vmatprep.subr.mxu0 0.0
      %1022 = vmatpush2.msra.mxu0 0.0
      %1023 = vmatprep.subr.mxu0 0.0
      %1024 = vmatpush2.msra.mxu0 0.0
      %1025 = vmatprep.subr.mxu0 0.0
      %1026 = vmatpush2.msra.mxu0 0.0
      %1027 = vmatprep.subr.mxu0 0.0
      %1028 = vmatpush2.msra.mxu0 0.0
      %1029 = vmatprep.mubr.f32.mxu0 0.0
      %1030 = vmatmul.mubr.f32.gmra.mxu0 %v963
      %v1031 = vpop.f32.mrf.mxu0
      %v1032 = vadd.f32 0.0, %v1031
      %v1033 = vpop.f32.mrf.mxu0
      %1034 = vdwg.mxu0
      %1036 = vset.pattern.permute.xlu0 0
      %1037 = vperm.xlu0 %1036, %v942
      %v1038 = vpop.permute.xlu0 %1037
      %v1039 = vlaneseq
      %v1040 = vshrl.u32 %v1039, 7
      %v1041 = vsub.s32 %v706, %v1040
      %v1042 = vrot.slane %v1038, %v1041
      %v1043 = vsel %vm754, %v1042, 0
      %1045 = vmatprep.subr.mxu0 0.0
      %1046 = vmatpush1.msra.mxu0 0.0
      %1047 = vmatprep.subr.mxu0 0.0
      %1048 = vmatpush1.msra.mxu0 0.0
      %1049 = vmatprep.subr.mxu0 0.0
      %1050 = vmatpush1.msra.mxu0 0.0
      %1051 = vmatprep.subr.mxu0 0.0
      %1052 = vmatpush1.msra.mxu0 0.0
      %1053 = vmatprep.subr.mxu0 0.0
      %1054 = vmatpush1.msra.mxu0 0.0
      %1055 = vmatprep.subr.mxu0 0.0
      %1056 = vmatpush1.msra.mxu0 0.0
      %1057 = vmatprep.subr.mxu0 0.0
      %1058 = vmatpush1.msra.mxu0 0.0
      %1059 = vmatprep.subr.mxu0 0.0
      %1060 = vmatpush1.msra.mxu0 0.0
      %1061 = vmatprep.subr.mxu0 0.0
      %1062 = vmatpush1.msra.mxu0 0.0
      %1063 = vmatprep.subr.mxu0 0.0
      %1064 = vmatpush1.msra.mxu0 0.0
      %1065 = vmatprep.subr.mxu0 0.0
      %1066 = vmatpush1.msra.mxu0 0.0
      %1067 = vmatprep.subr.mxu0 0.0
      %1068 = vmatpush1.msra.mxu0 0.0
      %1069 = vmatprep.subr.mxu0 0.0
      %1070 = vmatpush1.msra.mxu0 0.0
      %1071 = vmatprep.subr.mxu0 0.0
      %1072 = vmatpush1.msra.mxu0 0.0
      %1073 = vmatprep.subr.mxu0 0.0
      %1074 = vmatpush1.msra.mxu0 0.0
      %1075 = vmatprep.subr.mxu0 0.0
      %1076 = vmatpush1.msra.mxu0 %v459
      %1077 = vmatprep.subr.mxu0 0.0
      %1078 = vmatpush2.msra.mxu0 0.0
      %1079 = vmatprep.subr.mxu0 0.0
      %1080 = vmatpush2.msra.mxu0 0.0
      %1081 = vmatprep.subr.mxu0 0.0
      %1082 = vmatpush2.msra.mxu0 0.0
      %1083 = vmatprep.subr.mxu0 0.0
      %1084 = vmatpush2.msra.mxu0 0.0
      %1085 = vmatprep.subr.mxu0 0.0
      %1086 = vmatpush2.msra.mxu0 0.0
      %1087 = vmatprep.subr.mxu0 0.0
      %1088 = vmatpush2.msra.mxu0 0.0
      %1089 = vmatprep.subr.mxu0 0.0
      %1090 = vmatpush2.msra.mxu0 0.0
      %1091 = vmatprep.subr.mxu0 0.0
      %1092 = vmatpush2.msra.mxu0 0.0
      %1093 = vmatprep.subr.mxu0 0.0
      %1094 = vmatpush2.msra.mxu0 0.0
      %1095 = vmatprep.subr.mxu0 0.0
      %1096 = vmatpush2.msra.mxu0 0.0
      %1097 = vmatprep.subr.mxu0 0.0
      %1098 = vmatpush2.msra.mxu0 0.0
      %1099 = vmatprep.subr.mxu0 0.0
      %1100 = vmatpush2.msra.mxu0 0.0
      %1101 = vmatprep.subr.mxu0 0.0
      %1102 = vmatpush2.msra.mxu0 0.0
      %1103 = vmatprep.subr.mxu0 0.0
      %1104 = vmatpush2.msra.mxu0 0.0
      %1105 = vmatprep.subr.mxu0 0.0
      %1106 = vmatpush2.msra.mxu0 0.0
      %1107 = vmatprep.subr.mxu0 0.0
      %1108 = vmatpush2.msra.mxu0 0.0
      %1109 = vmatprep.mubr.f32.mxu0 0.0
      %1110 = vmatmul.mubr.f32.gmra.mxu0 %v1043
      %v1111 = vpop.f32.mrf.mxu0
      %v1112 = vadd.f32 0.0, %v1111
      %v1113 = vpop.f32.mrf.mxu0
      %1114 = vdwg.mxu0
      %1116 = vset.pattern.permute.xlu0 0
      %1117 = vperm.xlu0 %1116, %v944
      %v1118 = vpop.permute.xlu0 %1117
      %v1119 = vlaneseq
      %v1120 = vshrl.u32 %v1119, 7
      %v1121 = vsub.s32 %v706, %v1120
      %v1122 = vrot.slane %v1118, %v1121
      %v1123 = vsel %vm754, %v1122, 0
      %1125 = vmatprep.subr.mxu0 0.0
      %1126 = vmatpush1.msra.mxu0 0.0
      %1127 = vmatprep.subr.mxu0 0.0
      %1128 = vmatpush1.msra.mxu0 0.0
      %1129 = vmatprep.subr.mxu0 0.0
      %1130 = vmatpush1.msra.mxu0 0.0
      %1131 = vmatprep.subr.mxu0 0.0
      %1132 = vmatpush1.msra.mxu0 0.0
      %1133 = vmatprep.subr.mxu0 0.0
      %1134 = vmatpush1.msra.mxu0 0.0
      %1135 = vmatprep.subr.mxu0 0.0
      %1136 = vmatpush1.msra.mxu0 0.0
      %1137 = vmatprep.subr.mxu0 0.0
      %1138 = vmatpush1.msra.mxu0 0.0
      %1139 = vmatprep.subr.mxu0 0.0
      %1140 = vmatpush1.msra.mxu0 0.0
      %1141 = vmatprep.subr.mxu0 0.0
      %1142 = vmatpush1.msra.mxu0 0.0
      %1143 = vmatprep.subr.mxu0 0.0
      %1144 = vmatpush1.msra.mxu0 0.0
      %1145 = vmatprep.subr.mxu0 0.0
      %1146 = vmatpush1.msra.mxu0 0.0
      %1147 = vmatprep.subr.mxu0 0.0
      %1148 = vmatpush1.msra.mxu0 0.0
      %1149 = vmatprep.subr.mxu0 0.0
      %1150 = vmatpush1.msra.mxu0 0.0
      %1151 = vmatprep.subr.mxu0 0.0
      %1152 = vmatpush1.msra.mxu0 0.0
      %1153 = vmatprep.subr.mxu0 0.0
      %1154 = vmatpush1.msra.mxu0 0.0
      %1155 = vmatprep.subr.mxu0 0.0
      %1156 = vmatpush1.msra.mxu0 %v460
      %1157 = vmatprep.subr.mxu0 0.0
      %1158 = vmatpush2.msra.mxu0 0.0
      %1159 = vmatprep.subr.mxu0 0.0
      %1160 = vmatpush2.msra.mxu0 0.0
      %1161 = vmatprep.subr.mxu0 0.0
      %1162 = vmatpush2.msra.mxu0 0.0
      %1163 = vmatprep.subr.mxu0 0.0
      %1164 = vmatpush2.msra.mxu0 0.0
      %1165 = vmatprep.subr.mxu0 0.0
      %1166 = vmatpush2.msra.mxu0 0.0
      %1167 = vmatprep.subr.mxu0 0.0
      %1168 = vmatpush2.msra.mxu0 0.0
      %1169 = vmatprep.subr.mxu0 0.0
      %1170 = vmatpush2.msra.mxu0 0.0
      %1171 = vmatprep.subr.mxu0 0.0
      %1172 = vmatpush2.msra.mxu0 0.0
      %1173 = vmatprep.subr.mxu0 0.0
      %1174 = vmatpush2.msra.mxu0 0.0
      %1175 = vmatprep.subr.mxu0 0.0
      %1176 = vmatpush2.msra.mxu0 0.0
      %1177 = vmatprep.subr.mxu0 0.0
      %1178 = vmatpush2.msra.mxu0 0.0
      %1179 = vmatprep.subr.mxu0 0.0
      %1180 = vmatpush2.msra.mxu0 0.0
      %1181 = vmatprep.subr.mxu0 0.0
      %1182 = vmatpush2.msra.mxu0 0.0
      %1183 = vmatprep.subr.mxu0 0.0
      %1184 = vmatpush2.msra.mxu0 0.0
      %1185 = vmatprep.subr.mxu0 0.0
      %1186 = vmatpush2.msra.mxu0 0.0
      %1187 = vmatprep.subr.mxu0 0.0
      %1188 = vmatpush2.msra.mxu0 0.0
      %1189 = vmatprep.mubr.f32.mxu0 0.0
      %1190 = vmatmul.mubr.f32.gmra.mxu0 %v1123
      %v1191 = vpop.f32.mrf.mxu0
      %v1192 = vadd.f32 0.0, %v1191
      %v1193 = vpop.f32.mrf.mxu0
      %1194 = vdwg.mxu0
      %1196 = vset.pattern.permute.xlu0 0
      %1197 = vperm.xlu0 %1196, %v946
      %v1198 = vpop.permute.xlu0 %1197
      %v1199 = vlaneseq
      %v1200 = vshrl.u32 %v1199, 7
      %v1201 = vsub.s32 %v706, %v1200
      %v1202 = vrot.slane %v1198, %v1201
      %v1203 = vsel %vm754, %v1202, 0
      %1205 = vmatprep.subr.mxu0 0.0
      %1206 = vmatpush1.msra.mxu0 0.0
      %1207 = vmatprep.subr.mxu0 0.0
      %1208 = vmatpush1.msra.mxu0 0.0
      %1209 = vmatprep.subr.mxu0 0.0
      %1210 = vmatpush1.msra.mxu0 0.0
      %1211 = vmatprep.subr.mxu0 0.0
      %1212 = vmatpush1.msra.mxu0 0.0
      %1213 = vmatprep.subr.mxu0 0.0
      %1214 = vmatpush1.msra.mxu0 0.0
      %1215 = vmatprep.subr.mxu0 0.0
      %1216 = vmatpush1.msra.mxu0 0.0
      %1217 = vmatprep.subr.mxu0 0.0
      %1218 = vmatpush1.msra.mxu0 0.0
      %1219 = vmatprep.subr.mxu0 0.0
      %1220 = vmatpush1.msra.mxu0 0.0
      %1221 = vmatprep.subr.mxu0 0.0
      %1222 = vmatpush1.msra.mxu0 0.0
      %1223 = vmatprep.subr.mxu0 0.0
      %1224 = vmatpush1.msra.mxu0 0.0
      %1225 = vmatprep.subr.mxu0 0.0
      %1226 = vmatpush1.msra.mxu0 0.0
      %1227 = vmatprep.subr.mxu0 0.0
      %1228 = vmatpush1.msra.mxu0 0.0
      %1229 = vmatprep.subr.mxu0 0.0
      %1230 = vmatpush1.msra.mxu0 0.0
      %1231 = vmatprep.subr.mxu0 0.0
      %1232 = vmatpush1.msra.mxu0 0.0
      %1233 = vmatprep.subr.mxu0 0.0
      %1234 = vmatpush1.msra.mxu0 0.0
      %1235 = vmatprep.subr.mxu0 0.0
      %1236 = vmatpush1.msra.mxu0 %v461
      %1237 = vmatprep.subr.mxu0 0.0
      %1238 = vmatpush2.msra.mxu0 0.0
      %1239 = vmatprep.subr.mxu0 0.0
      %1240 = vmatpush2.msra.mxu0 0.0
      %1241 = vmatprep.subr.mxu0 0.0
      %1242 = vmatpush2.msra.mxu0 0.0
      %1243 = vmatprep.subr.mxu0 0.0
      %1244 = vmatpush2.msra.mxu0 0.0
      %1245 = vmatprep.subr.mxu0 0.0
      %1246 = vmatpush2.msra.mxu0 0.0
      %1247 = vmatprep.subr.mxu0 0.0
      %1248 = vmatpush2.msra.mxu0 0.0
      %1249 = vmatprep.subr.mxu0 0.0
      %1250 = vmatpush2.msra.mxu0 0.0
      %1251 = vmatprep.subr.mxu0 0.0
      %1252 = vmatpush2.msra.mxu0 0.0
      %1253 = vmatprep.subr.mxu0 0.0
      %1254 = vmatpush2.msra.mxu0 0.0
      %1255 = vmatprep.subr.mxu0 0.0
      %1256 = vmatpush2.msra.mxu0 0.0
      %1257 = vmatprep.subr.mxu0 0.0
      %1258 = vmatpush2.msra.mxu0 0.0
      %1259 = vmatprep.subr.mxu0 0.0
      %1260 = vmatpush2.msra.mxu0 0.0
      %1261 = vmatprep.subr.mxu0 0.0
      %1262 = vmatpush2.msra.mxu0 0.0
      %1263 = vmatprep.subr.mxu0 0.0
      %1264 = vmatpush2.msra.mxu0 0.0
      %1265 = vmatprep.subr.mxu0 0.0
      %1266 = vmatpush2.msra.mxu0 0.0
      %1267 = vmatprep.subr.mxu0 0.0
      %1268 = vmatpush2.msra.mxu0 0.0
      %1269 = vmatprep.mubr.f32.mxu0 0.0
      %1270 = vmatmul.mubr.f32.gmra.mxu0 %v1203
      %v1271 = vpop.f32.mrf.mxu0
      %v1272 = vadd.f32 0.0, %v1271
      %v1273 = vpop.f32.mrf.mxu0
      %1274 = vdwg.mxu0
      %1276 = vset.pattern.permute.xlu0 0
      %1277 = vperm.xlu0 %1276, %v948
      %v1278 = vpop.permute.xlu0 %1277
      %v1279 = vlaneseq
      %v1280 = vshrl.u32 %v1279, 7
      %v1281 = vsub.s32 %v706, %v1280
      %v1282 = vrot.slane %v1278, %v1281
      %v1283 = vsel %vm754, %v1282, 0
      %1285 = vmatprep.subr.mxu0 0.0
      %1286 = vmatpush1.msra.mxu0 0.0
      %1287 = vmatprep.subr.mxu0 0.0
      %1288 = vmatpush1.msra.mxu0 0.0
      %1289 = vmatprep.subr.mxu0 0.0
      %1290 = vmatpush1.msra.mxu0 0.0
      %1291 = vmatprep.subr.mxu0 0.0
      %1292 = vmatpush1.msra.mxu0 0.0
      %1293 = vmatprep.subr.mxu0 0.0
      %1294 = vmatpush1.msra.mxu0 0.0
      %1295 = vmatprep.subr.mxu0 0.0
      %1296 = vmatpush1.msra.mxu0 0.0
      %1297 = vmatprep.subr.mxu0 0.0
      %1298 = vmatpush1.msra.mxu0 0.0
      %1299 = vmatprep.subr.mxu0 0.0
      %1300 = vmatpush1.msra.mxu0 0.0
      %1301 = vmatprep.subr.mxu0 0.0
      %1302 = vmatpush1.msra.mxu0 0.0
      %1303 = vmatprep.subr.mxu0 0.0
      %1304 = vmatpush1.msra.mxu0 0.0
      %1305 = vmatprep.subr.mxu0 0.0
      %1306 = vmatpush1.msra.mxu0 0.0
      %1307 = vmatprep.subr.mxu0 0.0
      %1308 = vmatpush1.msra.mxu0 0.0
      %1309 = vmatprep.subr.mxu0 0.0
      %1310 = vmatpush1.msra.mxu0 0.0
      %1311 = vmatprep.subr.mxu0 0.0
      %1312 = vmatpush1.msra.mxu0 0.0
      %1313 = vmatprep.subr.mxu0 0.0
      %1314 = vmatpush1.msra.mxu0 0.0
      %1315 = vmatprep.subr.mxu0 0.0
      %1316 = vmatpush1.msra.mxu0 %v462
      %1317 = vmatprep.subr.mxu0 0.0
      %1318 = vmatpush2.msra.mxu0 0.0
      %1319 = vmatprep.subr.mxu0 0.0
      %1320 = vmatpush2.msra.mxu0 0.0
      %1321 = vmatprep.subr.mxu0 0.0
      %1322 = vmatpush2.msra.mxu0 0.0
      %1323 = vmatprep.subr.mxu0 0.0
      %1324 = vmatpush2.msra.mxu0 0.0
      %1325 = vmatprep.subr.mxu0 0.0
      %1326 = vmatpush2.msra.mxu0 0.0
      %1327 = vmatprep.subr.mxu0 0.0
      %1328 = vmatpush2.msra.mxu0 0.0
      %1329 = vmatprep.subr.mxu0 0.0
      %1330 = vmatpush2.msra.mxu0 0.0
      %1331 = vmatprep.subr.mxu0 0.0
      %1332 = vmatpush2.msra.mxu0 0.0
      %1333 = vmatprep.subr.mxu0 0.0
      %1334 = vmatpush2.msra.mxu0 0.0
      %1335 = vmatprep.subr.mxu0 0.0
      %1336 = vmatpush2.msra.mxu0 0.0
      %1337 = vmatprep.subr.mxu0 0.0
      %1338 = vmatpush2.msra.mxu0 0.0
      %1339 = vmatprep.subr.mxu0 0.0
      %1340 = vmatpush2.msra.mxu0 0.0
      %1341 = vmatprep.subr.mxu0 0.0
      %1342 = vmatpush2.msra.mxu0 0.0
      %1343 = vmatprep.subr.mxu0 0.0
      %1344 = vmatpush2.msra.mxu0 0.0
      %1345 = vmatprep.subr.mxu0 0.0
      %1346 = vmatpush2.msra.mxu0 0.0
      %1347 = vmatprep.subr.mxu0 0.0
      %1348 = vmatpush2.msra.mxu0 0.0
      %1349 = vmatprep.mubr.f32.mxu0 0.0
      %1350 = vmatmul.mubr.f32.gmra.mxu0 %v1283
      %v1351 = vpop.f32.mrf.mxu0
      %v1352 = vadd.f32 0.0, %v1351
      %v1353 = vpop.f32.mrf.mxu0
      %1354 = vdwg.mxu0
      %1356 = vset.pattern.permute.xlu0 0
      %1357 = vperm.xlu0 %1356, %v950
      %v1358 = vpop.permute.xlu0 %1357
      %v1359 = vlaneseq
      %v1360 = vshrl.u32 %v1359, 7
      %v1361 = vsub.s32 %v706, %v1360
      %v1362 = vrot.slane %v1358, %v1361
      %v1363 = vsel %vm754, %v1362, 0
      %1365 = vmatprep.subr.mxu0 0.0
      %1366 = vmatpush1.msra.mxu0 0.0
      %1367 = vmatprep.subr.mxu0 0.0
      %1368 = vmatpush1.msra.mxu0 0.0
      %1369 = vmatprep.subr.mxu0 0.0
      %1370 = vmatpush1.msra.mxu0 0.0
      %1371 = vmatprep.subr.mxu0 0.0
      %1372 = vmatpush1.msra.mxu0 0.0
      %1373 = vmatprep.subr.mxu0 0.0
      %1374 = vmatpush1.msra.mxu0 0.0
      %1375 = vmatprep.subr.mxu0 0.0
      %1376 = vmatpush1.msra.mxu0 0.0
      %1377 = vmatprep.subr.mxu0 0.0
      %1378 = vmatpush1.msra.mxu0 0.0
      %1379 = vmatprep.subr.mxu0 0.0
      %1380 = vmatpush1.msra.mxu0 0.0
      %1381 = vmatprep.subr.mxu0 0.0
      %1382 = vmatpush1.msra.mxu0 0.0
      %1383 = vmatprep.subr.mxu0 0.0
      %1384 = vmatpush1.msra.mxu0 0.0
      %1385 = vmatprep.subr.mxu0 0.0
      %1386 = vmatpush1.msra.mxu0 0.0
      %1387 = vmatprep.subr.mxu0 0.0
      %1388 = vmatpush1.msra.mxu0 0.0
      %1389 = vmatprep.subr.mxu0 0.0
      %1390 = vmatpush1.msra.mxu0 0.0
      %1391 = vmatprep.subr.mxu0 0.0
      %1392 = vmatpush1.msra.mxu0 0.0
      %1393 = vmatprep.subr.mxu0 0.0
      %1394 = vmatpush1.msra.mxu0 0.0
      %1395 = vmatprep.subr.mxu0 0.0
      %1396 = vmatpush1.msra.mxu0 %v463
      %1397 = vmatprep.subr.mxu0 0.0
      %1398 = vmatpush2.msra.mxu0 0.0
      %1399 = vmatprep.subr.mxu0 0.0
      %1400 = vmatpush2.msra.mxu0 0.0
      %1401 = vmatprep.subr.mxu0 0.0
      %1402 = vmatpush2.msra.mxu0 0.0
      %1403 = vmatprep.subr.mxu0 0.0
      %1404 = vmatpush2.msra.mxu0 0.0
      %1405 = vmatprep.subr.mxu0 0.0
      %1406 = vmatpush2.msra.mxu0 0.0
      %1407 = vmatprep.subr.mxu0 0.0
      %1408 = vmatpush2.msra.mxu0 0.0
      %1409 = vmatprep.subr.mxu0 0.0
      %1410 = vmatpush2.msra.mxu0 0.0
      %1411 = vmatprep.subr.mxu0 0.0
      %1412 = vmatpush2.msra.mxu0 0.0
      %1413 = vmatprep.subr.mxu0 0.0
      %1414 = vmatpush2.msra.mxu0 0.0
      %1415 = vmatprep.subr.mxu0 0.0
      %1416 = vmatpush2.msra.mxu0 0.0
      %1417 = vmatprep.subr.mxu0 0.0
      %1418 = vmatpush2.msra.mxu0 0.0
      %1419 = vmatprep.subr.mxu0 0.0
      %1420 = vmatpush2.msra.mxu0 0.0
      %1421 = vmatprep.subr.mxu0 0.0
      %1422 = vmatpush2.msra.mxu0 0.0
      %1423 = vmatprep.subr.mxu0 0.0
      %1424 = vmatpush2.msra.mxu0 0.0
      %1425 = vmatprep.subr.mxu0 0.0
      %1426 = vmatpush2.msra.mxu0 0.0
      %1427 = vmatprep.subr.mxu0 0.0
      %1428 = vmatpush2.msra.mxu0 0.0
      %1429 = vmatprep.mubr.f32.mxu0 0.0
      %1430 = vmatmul.mubr.f32.gmra.mxu0 %v1363
      %v1431 = vpop.f32.mrf.mxu0
      %v1432 = vadd.f32 0.0, %v1431
      %v1433 = vpop.f32.mrf.mxu0
      %1434 = vdwg.mxu0
      %1436 = vset.pattern.permute.xlu0 0
      %1437 = vperm.xlu0 %1436, %v952
      %v1438 = vpop.permute.xlu0 %1437
      %v1439 = vlaneseq
      %v1440 = vshrl.u32 %v1439, 7
      %v1441 = vsub.s32 %v706, %v1440
      %v1442 = vrot.slane %v1438, %v1441
      %v1443 = vsel %vm754, %v1442, 0
      %1445 = vmatprep.subr.mxu0 0.0
      %1446 = vmatpush1.msra.mxu0 0.0
      %1447 = vmatprep.subr.mxu0 0.0
      %1448 = vmatpush1.msra.mxu0 0.0
      %1449 = vmatprep.subr.mxu0 0.0
      %1450 = vmatpush1.msra.mxu0 0.0
      %1451 = vmatprep.subr.mxu0 0.0
      %1452 = vmatpush1.msra.mxu0 0.0
      %1453 = vmatprep.subr.mxu0 0.0
      %1454 = vmatpush1.msra.mxu0 0.0
      %1455 = vmatprep.subr.mxu0 0.0
      %1456 = vmatpush1.msra.mxu0 0.0
      %1457 = vmatprep.subr.mxu0 0.0
      %1458 = vmatpush1.msra.mxu0 0.0
      %1459 = vmatprep.subr.mxu0 0.0
      %1460 = vmatpush1.msra.mxu0 0.0
      %1461 = vmatprep.subr.mxu0 0.0
      %1462 = vmatpush1.msra.mxu0 0.0
      %1463 = vmatprep.subr.mxu0 0.0
      %1464 = vmatpush1.msra.mxu0 0.0
      %1465 = vmatprep.subr.mxu0 0.0
      %1466 = vmatpush1.msra.mxu0 0.0
      %1467 = vmatprep.subr.mxu0 0.0
      %1468 = vmatpush1.msra.mxu0 0.0
      %1469 = vmatprep.subr.mxu0 0.0
      %1470 = vmatpush1.msra.mxu0 0.0
      %1471 = vmatprep.subr.mxu0 0.0
      %1472 = vmatpush1.msra.mxu0 0.0
      %1473 = vmatprep.subr.mxu0 0.0
      %1474 = vmatpush1.msra.mxu0 0.0
      %1475 = vmatprep.subr.mxu0 0.0
      %1476 = vmatpush1.msra.mxu0 %v464
      %1477 = vmatprep.subr.mxu0 0.0
      %1478 = vmatpush2.msra.mxu0 0.0
      %1479 = vmatprep.subr.mxu0 0.0
      %1480 = vmatpush2.msra.mxu0 0.0
      %1481 = vmatprep.subr.mxu0 0.0
      %1482 = vmatpush2.msra.mxu0 0.0
      %1483 = vmatprep.subr.mxu0 0.0
      %1484 = vmatpush2.msra.mxu0 0.0
      %1485 = vmatprep.subr.mxu0 0.0
      %1486 = vmatpush2.msra.mxu0 0.0
      %1487 = vmatprep.subr.mxu0 0.0
      %1488 = vmatpush2.msra.mxu0 0.0
      %1489 = vmatprep.subr.mxu0 0.0
      %1490 = vmatpush2.msra.mxu0 0.0
      %1491 = vmatprep.subr.mxu0 0.0
      %1492 = vmatpush2.msra.mxu0 0.0
      %1493 = vmatprep.subr.mxu0 0.0
      %1494 = vmatpush2.msra.mxu0 0.0
      %1495 = vmatprep.subr.mxu0 0.0
      %1496 = vmatpush2.msra.mxu0 0.0
      %1497 = vmatprep.subr.mxu0 0.0
      %1498 = vmatpush2.msra.mxu0 0.0
      %1499 = vmatprep.subr.mxu0 0.0
      %1500 = vmatpush2.msra.mxu0 0.0
      %1501 = vmatprep.subr.mxu0 0.0
      %1502 = vmatpush2.msra.mxu0 0.0
      %1503 = vmatprep.subr.mxu0 0.0
      %1504 = vmatpush2.msra.mxu0 0.0
      %1505 = vmatprep.subr.mxu0 0.0
      %1506 = vmatpush2.msra.mxu0 0.0
      %1507 = vmatprep.subr.mxu0 0.0
      %1508 = vmatpush2.msra.mxu0 0.0
      %1509 = vmatprep.mubr.f32.mxu0 0.0
      %1510 = vmatmul.mubr.f32.gmra.mxu0 %v1443
      %v1511 = vpop.f32.mrf.mxu0
      %v1512 = vadd.f32 0.0, %v1511
      %v1513 = vpop.f32.mrf.mxu0
      %1514 = vdwg.mxu0
      %1516 = vset.pattern.permute.xlu0 0
      %1517 = vperm.xlu0 %1516, %v954
      %v1518 = vpop.permute.xlu0 %1517
      %v1519 = vlaneseq
      %v1520 = vshrl.u32 %v1519, 7
      %v1521 = vsub.s32 %v706, %v1520
      %v1522 = vrot.slane %v1518, %v1521
      %v1523 = vsel %vm754, %v1522, 0
      %1525 = vmatprep.subr.mxu0 0.0
      %1526 = vmatpush1.msra.mxu0 0.0
      %1527 = vmatprep.subr.mxu0 0.0
      %1528 = vmatpush1.msra.mxu0 0.0
      %1529 = vmatprep.subr.mxu0 0.0
      %1530 = vmatpush1.msra.mxu0 0.0
      %1531 = vmatprep.subr.mxu0 0.0
      %1532 = vmatpush1.msra.mxu0 0.0
      %1533 = vmatprep.subr.mxu0 0.0
      %1534 = vmatpush1.msra.mxu0 0.0
      %1535 = vmatprep.subr.mxu0 0.0
      %1536 = vmatpush1.msra.mxu0 0.0
      %1537 = vmatprep.subr.mxu0 0.0
      %1538 = vmatpush1.msra.mxu0 0.0
      %1539 = vmatprep.subr.mxu0 0.0
      %1540 = vmatpush1.msra.mxu0 0.0
      %1541 = vmatprep.subr.mxu0 0.0
      %1542 = vmatpush1.msra.mxu0 0.0
      %1543 = vmatprep.subr.mxu0 0.0
      %1544 = vmatpush1.msra.mxu0 0.0
      %1545 = vmatprep.subr.mxu0 0.0
      %1546 = vmatpush1.msra.mxu0 0.0
      %1547 = vmatprep.subr.mxu0 0.0
      %1548 = vmatpush1.msra.mxu0 0.0
      %1549 = vmatprep.subr.mxu0 0.0
      %1550 = vmatpush1.msra.mxu0 0.0
      %1551 = vmatprep.subr.mxu0 0.0
      %1552 = vmatpush1.msra.mxu0 0.0
      %1553 = vmatprep.subr.mxu0 0.0
      %1554 = vmatpush1.msra.mxu0 0.0
      %1555 = vmatprep.subr.mxu0 0.0
      %1556 = vmatpush1.msra.mxu0 %v465
      %1557 = vmatprep.subr.mxu0 0.0
      %1558 = vmatpush2.msra.mxu0 0.0
      %1559 = vmatprep.subr.mxu0 0.0
      %1560 = vmatpush2.msra.mxu0 0.0
      %1561 = vmatprep.subr.mxu0 0.0
      %1562 = vmatpush2.msra.mxu0 0.0
      %1563 = vmatprep.subr.mxu0 0.0
      %1564 = vmatpush2.msra.mxu0 0.0
      %1565 = vmatprep.subr.mxu0 0.0
      %1566 = vmatpush2.msra.mxu0 0.0
      %1567 = vmatprep.subr.mxu0 0.0
      %1568 = vmatpush2.msra.mxu0 0.0
      %1569 = vmatprep.subr.mxu0 0.0
      %1570 = vmatpush2.msra.mxu0 0.0
      %1571 = vmatprep.subr.mxu0 0.0
      %1572 = vmatpush2.msra.mxu0 0.0
      %1573 = vmatprep.subr.mxu0 0.0
      %1574 = vmatpush2.msra.mxu0 0.0
      %1575 = vmatprep.subr.mxu0 0.0
      %1576 = vmatpush2.msra.mxu0 0.0
      %1577 = vmatprep.subr.mxu0 0.0
      %1578 = vmatpush2.msra.mxu0 0.0
      %1579 = vmatprep.subr.mxu0 0.0
      %1580 = vmatpush2.msra.mxu0 0.0
      %1581 = vmatprep.subr.mxu0 0.0
      %1582 = vmatpush2.msra.mxu0 0.0
      %1583 = vmatprep.subr.mxu0 0.0
      %1584 = vmatpush2.msra.mxu0 0.0
      %1585 = vmatprep.subr.mxu0 0.0
      %1586 = vmatpush2.msra.mxu0 0.0
      %1587 = vmatprep.subr.mxu0 0.0
      %1588 = vmatpush2.msra.mxu0 0.0
      %1589 = vmatprep.mubr.f32.mxu0 0.0
      %1590 = vmatmul.mubr.f32.gmra.mxu0 %v1523
      %v1591 = vpop.f32.mrf.mxu0
      %v1592 = vadd.f32 0.0, %v1591
      %v1593 = vpop.f32.mrf.mxu0
      %1594 = vdwg.mxu0
      %v1603 = vrot.slane %v1112, 7
      %v1604 = vsel %vm739, %v1603, %v1032
      %v1605 = vrot.slane %v1192, 6
      %v1606 = vsel %vm741, %v1605, %v1604
      %v1607 = vrot.slane %v1272, 5
      %v1608 = vsel %vm743, %v1607, %v1606
      %v1609 = vrot.slane %v1352, 4
      %v1610 = vsel %vm745, %v1609, %v1608
      %v1611 = vrot.slane %v1432, 3
      %v1612 = vsel %vm747, %v1611, %v1610
      %v1613 = vrot.slane %v1512, 2
      %v1614 = vsel %vm749, %v1613, %v1612
      %v1615 = vrot.slane %v1592, 1
      %v1616 = vsel %vm751, %v1615, %v1614
      %1617 = vrot.lane.b32.xlu0 %v1616, 16
      %v1618 = vpop.permute.xlu0 %1617
      %vm1620 = vcmask 130048
      %v1621 = vsel %vm1620, %v456, %v1618
      %v1622 = vld [vmem:[%s8] sm:$0xff]
      %v1623 = vld [vmem:[%s8 + $0x8] sm:$0xff]
      %v1624 = vld [vmem:[%s8 + $0x10] sm:$0xff]
      %v1625 = vld [vmem:[%s8 + $0x18] sm:$0xff]
      %v1626 = vld [vmem:[%s8 + $0x20] sm:$0xff]
      %v1627 = vld [vmem:[%s8 + $0x28] sm:$0xff]
      %v1628 = vld [vmem:[%s10] sm:$0x1]
      %v1630 = vlaneseq
      %v1631 = vshrl.u32 %v1630, 7
      %v1632 = vsub.s32 0, %v1631
      %v1633 = vrot.slane %v1628, %v1632
      %vm1635 = vcmask 392192
      %v1637 = vsel %vm1635, %v1621, 0
      %1639 = vmatprep.subr.mxu0 0.0
      %1640 = vmatpush1.msra.mxu0 0.0
      %1641 = vmatprep.subr.mxu0 0.0
      %1642 = vmatpush1.msra.mxu0 0.0
      %1643 = vmatprep.subr.mxu0 0.0
      %1644 = vmatpush1.msra.mxu0 0.0
      %1645 = vmatprep.subr.mxu0 0.0
      %1646 = vmatpush1.msra.mxu0 0.0
      %1647 = vmatprep.subr.mxu0 0.0
      %1648 = vmatpush1.msra.mxu0 0.0
      %1649 = vmatprep.subr.mxu0 0.0
      %1650 = vmatpush1.msra.mxu0 0.0
      %1651 = vmatprep.subr.mxu0 0.0
      %1652 = vmatpush1.msra.mxu0 0.0
      %1653 = vmatprep.subr.mxu0 0.0
      %1654 = vmatpush1.msra.mxu0 0.0
      %1655 = vmatprep.subr.mxu0 0.0
      %1656 = vmatpush1.msra.mxu0 0.0
      %1657 = vmatprep.subr.mxu0 0.0
      %1658 = vmatpush1.msra.mxu0 0.0
      %1659 = vmatprep.subr.mxu0 0.0
      %1660 = vmatpush1.msra.mxu0 %v1627
      %1661 = vmatprep.subr.mxu0 0.0
      %1662 = vmatpush1.msra.mxu0 %v1626
      %1663 = vmatprep.subr.mxu0 0.0
      %1664 = vmatpush1.msra.mxu0 %v1625
      %1665 = vmatprep.subr.mxu0 0.0
      %1666 = vmatpush1.msra.mxu0 %v1624
      %1667 = vmatprep.subr.mxu0 0.0
      %1668 = vmatpush1.msra.mxu0 %v1623
      %1669 = vmatprep.subr.mxu0 0.0
      %1670 = vmatpush1.msra.mxu0 %v1622
      %1671 = vmatprep.subr.mxu0 0.0
      %1672 = vmatpush2.msra.mxu0 0.0
      %1673 = vmatprep.subr.mxu0 0.0
      %1674 = vmatpush2.msra.mxu0 0.0
      %1675 = vmatprep.subr.mxu0 0.0
      %1676 = vmatpush2.msra.mxu0 0.0
      %1677 = vmatprep.subr.mxu0 0.0
      %1678 = vmatpush2.msra.mxu0 0.0
      %1679 = vmatprep.subr.mxu0 0.0
      %1680 = vmatpush2.msra.mxu0 0.0
      %1681 = vmatprep.subr.mxu0 0.0
      %1682 = vmatpush2.msra.mxu0 0.0
      %1683 = vmatprep.subr.mxu0 0.0
      %1684 = vmatpush2.msra.mxu0 0.0
      %1685 = vmatprep.subr.mxu0 0.0
      %1686 = vmatpush2.msra.mxu0 0.0
      %1687 = vmatprep.subr.mxu0 0.0
      %1688 = vmatpush2.msra.mxu0 0.0
      %1689 = vmatprep.subr.mxu0 0.0
      %1690 = vmatpush2.msra.mxu0 0.0
      %1691 = vmatprep.subr.mxu0 0.0
      %1692 = vmatpush2.msra.mxu0 0.0
      %1693 = vmatprep.subr.mxu0 0.0
      %1694 = vmatpush2.msra.mxu0 0.0
      %1695 = vmatprep.subr.mxu0 0.0
      %1696 = vmatpush2.msra.mxu0 0.0
      %1697 = vmatprep.subr.mxu0 0.0
      %1698 = vmatpush2.msra.mxu0 0.0
      %1699 = vmatprep.subr.mxu0 0.0
      %1700 = vmatpush2.msra.mxu0 0.0
      %1701 = vmatprep.subr.mxu0 0.0
      %1702 = vmatpush2.msra.mxu0 0.0
      %1703 = vmatprep.mubr.f32.mxu0 0.0
      %1704 = vmatmul.mubr.f32.gmra.mxu0 %v1637
      %v1705 = vpop.f32.mrf.mxu0
      %v1706 = vadd.f32 %v1633, %v1705
      %v1707 = vpop.f32.mrf.mxu0
      %1708 = vdwg.mxu0
      %v1709 = vld [vmem:[%s9] sm:$0xff]
      %v1710 = vld [vmem:[%s9 + $0x8] sm:$0xff]
      %v1711 = vld [vmem:[%s9 + $0x10] sm:$0xff]
      %v1712 = vld [vmem:[%s9 + $0x18] sm:$0xff]
      %v1713 = vld [vmem:[%s11] sm:$0x1]
      %v1715 = vlaneseq
      %v1716 = vshrl.u32 %v1715, 7
      %v1717 = vsub.s32 0, %v1716
      %v1718 = vrot.slane %v1713, %v1717
      %1720 = vmatprep.subr.mxu0 0.0
      %1721 = vmatpush1.msra.mxu0 0.0
      %1722 = vmatprep.subr.mxu0 0.0
      %1723 = vmatpush1.msra.mxu0 0.0
      %1724 = vmatprep.subr.mxu0 0.0
      %1725 = vmatpush1.msra.mxu0 0.0
      %1726 = vmatprep.subr.mxu0 0.0
      %1727 = vmatpush1.msra.mxu0 0.0
      %1728 = vmatprep.subr.mxu0 0.0
      %1729 = vmatpush1.msra.mxu0 0.0
      %1730 = vmatprep.subr.mxu0 0.0
      %1731 = vmatpush1.msra.mxu0 0.0
      %1732 = vmatprep.subr.mxu0 0.0
      %1733 = vmatpush1.msra.mxu0 0.0
      %1734 = vmatprep.subr.mxu0 0.0
      %1735 = vmatpush1.msra.mxu0 0.0
      %1736 = vmatprep.subr.mxu0 0.0
      %1737 = vmatpush1.msra.mxu0 0.0
      %1738 = vmatprep.subr.mxu0 0.0
      %1739 = vmatpush1.msra.mxu0 0.0
      %1740 = vmatprep.subr.mxu0 0.0
      %1741 = vmatpush1.msra.mxu0 0.0
      %1742 = vmatprep.subr.mxu0 0.0
      %1743 = vmatpush1.msra.mxu0 0.0
      %1744 = vmatprep.subr.mxu0 0.0
      %1745 = vmatpush1.msra.mxu0 %v1712
      %1746 = vmatprep.subr.mxu0 0.0
      %1747 = vmatpush1.msra.mxu0 %v1711
      %1748 = vmatprep.subr.mxu0 0.0
      %1749 = vmatpush1.msra.mxu0 %v1710
      %1750 = vmatprep.subr.mxu0 0.0
      %1751 = vmatpush1.msra.mxu0 %v1709
      %1752 = vmatprep.subr.mxu0 0.0
      %1753 = vmatpush2.msra.mxu0 0.0
      %1754 = vmatprep.subr.mxu0 0.0
      %1755 = vmatpush2.msra.mxu0 0.0
      %1756 = vmatprep.subr.mxu0 0.0
      %1757 = vmatpush2.msra.mxu0 0.0
      %1758 = vmatprep.subr.mxu0 0.0
      %1759 = vmatpush2.msra.mxu0 0.0
      %1760 = vmatprep.subr.mxu0 0.0
      %1761 = vmatpush2.msra.mxu0 0.0
      %1762 = vmatprep.subr.mxu0 0.0
      %1763 = vmatpush2.msra.mxu0 0.0
      %1764 = vmatprep.subr.mxu0 0.0
      %1765 = vmatpush2.msra.mxu0 0.0
      %1766 = vmatprep.subr.mxu0 0.0
      %1767 = vmatpush2.msra.mxu0 0.0
      %1768 = vmatprep.subr.mxu0 0.0
      %1769 = vmatpush2.msra.mxu0 0.0
      %1770 = vmatprep.subr.mxu0 0.0
      %1771 = vmatpush2.msra.mxu0 0.0
      %1772 = vmatprep.subr.mxu0 0.0
      %1773 = vmatpush2.msra.mxu0 0.0
      %1774 = vmatprep.subr.mxu0 0.0
      %1775 = vmatpush2.msra.mxu0 0.0
      %1776 = vmatprep.subr.mxu0 0.0
      %1777 = vmatpush2.msra.mxu0 0.0
      %1778 = vmatprep.subr.mxu0 0.0
      %1779 = vmatpush2.msra.mxu0 0.0
      %1780 = vmatprep.subr.mxu0 0.0
      %1781 = vmatpush2.msra.mxu0 0.0
      %1782 = vmatprep.subr.mxu0 0.0
      %1783 = vmatpush2.msra.mxu0 0.0
      %1784 = vmatprep.mubr.f32.mxu0 0.0
      %1785 = vmatmul.mubr.f32.gmra.mxu0 %v472
      %v1786 = vpop.f32.mrf.mxu0
      %v1787 = vadd.f32 %v1718, %v1786
      %v1788 = vpop.f32.mrf.mxu0
      %1789 = vdwg.mxu0
      %v1790 = vadd.f32 %v1706, %v1787
      %v1791 = vxor.u32 %v1790, 2147483648
      %v1792 = vmul.f32 %v1791, 1.442695
      %v1793 = vpow.pop %v1792
      %v1794 = vadd.f32 %v1793, 1.0
      %v1795 = vrcp.pop %v1794
      %v1796 = vmul.f32 1.0, %v1795
      %1798 = vrot.lane.b32.xlu0 %v1787, 64
      %v1799 = vpop.permute.xlu0 %1798
      %v1801 = vmul.f32 %v1796, %v1799
      %1803 = vrot.lane.b32.xlu0 %v1801, 64
      %v1804 = vpop.permute.xlu0 %1803
      %v1806 = vadd.f32 %v1706, %v1804
      %v1807 = vtanh.pop %v1806
      %v1808 = vsub.f32 1.0, %v1796
      %1810 = vrot.lane.b32.xlu0 %v1807, 96
      %v1811 = vpop.permute.xlu0 %1810
      %v1813 = vmul.f32 %v1808, %v1811
      %1814 = vrot.lane.b32.xlu0 %v457, 32
      %v1815 = vpop.permute.xlu0 %1814
      %v1817 = vmul.f32 %v1796, %v1815
      %v1818 = vadd.f32 %v1813, %v1817
      %1820 = vrot.lane.b32.xlu0 %v1818, 96
      %v1821 = vpop.permute.xlu0 %1820
      %1823 = vrot.lane.b32.xlu0 %v1616, 32
      %v1824 = vpop.permute.xlu0 %1823
      %1827 = vrot.lane.b32.xlu0 %v456, 64
      %v1828 = vpop.permute.xlu0 %1827
      %v1830 = vsel %vm470, %v1821, %v1824
      %vm1831 = vcmask 523264
      %v1832 = vsel %vm1831, %v1830, %v1828
      %v1833 = vld [vmem:[%s12] sm:$0xff]
      %v1834 = vld [vmem:[%s12 + $0x8] sm:$0xff]
      %v1835 = vld [vmem:[%s12 + $0x10] sm:$0xff]
      %v1836 = vld [vmem:[%s12 + $0x18] sm:$0xff]
      %v1837 = vld [vmem:[%s12 + $0x20] sm:$0xff]
      %v1838 = vld [vmem:[%s12 + $0x28] sm:$0xff]
      %v1839 = vld [vmem:[%s12 + $0x30] sm:$0xff]
      %v1840 = vld [vmem:[%s12 + $0x38] sm:$0xff]
      %v1841 = vld [vmem:[%s12 + $0x40] sm:$0xff]
      %v1842 = vld [vmem:[%s12 + $0x48] sm:$0xff]
      %v1843 = vld [vmem:[%s13] sm:$0x1]
      %v1845 = vlaneseq
      %v1846 = vshrl.u32 %v1845, 7
      %v1847 = vsub.s32 0, %v1846
      %v1848 = vrot.slane %v1843, %v1847
      %vm1850 = vcmask 654336
      %v1852 = vsel %vm1850, %v1832, 0
      %1854 = vmatprep.subr.mxu0 0.0
      %1855 = vmatpush1.msra.mxu0 0.0
      %1856 = vmatprep.subr.mxu0 0.0
      %1857 = vmatpush1.msra.mxu0 0.0
      %1858 = vmatprep.subr.mxu0 0.0
      %1859 = vmatpush1.msra.mxu0 0.0
      %1860 = vmatprep.subr.mxu0 0.0
      %1861 = vmatpush1.msra.mxu0 0.0
      %1862 = vmatprep.subr.mxu0 0.0
      %1863 = vmatpush1.msra.mxu0 0.0
      %1864 = vmatprep.subr.mxu0 0.0
      %1865 = vmatpush1.msra.mxu0 0.0
      %1866 = vmatprep.subr.mxu0 0.0
      %1867 = vmatpush1.msra.mxu0 %v1842
      %1868 = vmatprep.subr.mxu0 0.0
      %1869 = vmatpush1.msra.mxu0 %v1841
      %1870 = vmatprep.subr.mxu0 0.0
      %1871 = vmatpush1.msra.mxu0 %v1840
      %1872 = vmatprep.subr.mxu0 0.0
      %1873 = vmatpush1.msra.mxu0 %v1839
      %1874 = vmatprep.subr.mxu0 0.0
      %1875 = vmatpush1.msra.mxu0 %v1838
      %1876 = vmatprep.subr.mxu0 0.0
      %1877 = vmatpush1.msra.mxu0 %v1837
      %1878 = vmatprep.subr.mxu0 0.0
      %1879 = vmatpush1.msra.mxu0 %v1836
      %1880 = vmatprep.subr.mxu0 0.0
      %1881 = vmatpush1.msra.mxu0 %v1835
      %1882 = vmatprep.subr.mxu0 0.0
      %1883 = vmatpush1.msra.mxu0 %v1834
      %1884 = vmatprep.subr.mxu0 0.0
      %1885 = vmatpush1.msra.mxu0 %v1833
      %1886 = vmatprep.subr.mxu0 0.0
      %1887 = vmatpush2.msra.mxu0 0.0
      %1888 = vmatprep.subr.mxu0 0.0
      %1889 = vmatpush2.msra.mxu0 0.0
      %1890 = vmatprep.subr.mxu0 0.0
      %1891 = vmatpush2.msra.mxu0 0.0
      %1892 = vmatprep.subr.mxu0 0.0
      %1893 = vmatpush2.msra.mxu0 0.0
      %1894 = vmatprep.subr.mxu0 0.0
      %1895 = vmatpush2.msra.mxu0 0.0
      %1896 = vmatprep.subr.mxu0 0.0
      %1897 = vmatpush2.msra.mxu0 0.0
      %1898 = vmatprep.subr.mxu0 0.0
      %1899 = vmatpush2.msra.mxu0 0.0
      %1900 = vmatprep.subr.mxu0 0.0
      %1901 = vmatpush2.msra.mxu0 0.0
      %1902 = vmatprep.subr.mxu0 0.0
      %1903 = vmatpush2.msra.mxu0 0.0
      %1904 = vmatprep.subr.mxu0 0.0
      %1905 = vmatpush2.msra.mxu0 0.0
      %1906 = vmatprep.subr.mxu0 0.0
      %1907 = vmatpush2.msra.mxu0 0.0
      %1908 = vmatprep.subr.mxu0 0.0
      %1909 = vmatpush2.msra.mxu0 0.0
      %1910 = vmatprep.subr.mxu0 0.0
      %1911 = vmatpush2.msra.mxu0 0.0
      %1912 = vmatprep.subr.mxu0 0.0
      %1913 = vmatpush2.msra.mxu0 0.0
      %1914 = vmatprep.subr.mxu0 0.0
      %1915 = vmatpush2.msra.mxu0 0.0
      %1916 = vmatprep.subr.mxu0 0.0
      %1917 = vmatpush2.msra.mxu0 0.0
      %1918 = vmatprep.mubr.f32.mxu0 0.0
      %1919 = vmatmul.mubr.f32.gmra.mxu0 %v1852
      %v1920 = vpop.f32.mrf.mxu0
      %v1921 = vadd.f32 %v1848, %v1920
      %v1922 = vpop.f32.mrf.mxu0
      %1923 = vdwg.mxu0
      %1924 = vst [vmem:[%s445] sm:$0xff] %v1921
      %1925 = vst.msk [vmem:[#allocation2] sm:$0xff] %vm470, %v1821
      %1926 = vmax.xlane.f32.xlu0 %v1921
      %v1927 = vpop.xlane.xlu0 %1926
      %vm1928 = vcmp.eq.f32.partialorder %v1921, %v1927
      %v1929 = vsel %vm1928, %v706, 128
      %v1930 = vand.u32 %v1929, 65535
      %v1931 = vshra.s32 %v1929, 16
      %v1932 = vcvt.s32.f32 %v1930
      %v1933 = vcvt.s32.f32 %v1931
      %1934 = vmin.xlane.f32.xlu0 %v1933
      %v1935 = vpop.xlane.xlu0 %1934
      %vm1936 = vcmp.eq.f32.partialorder %v1933, %v1935
      %v1937 = vsel %vm1936, %v1932, inf
      %1938 = vmin.xlane.f32.xlu0 %v1937
      %v1939 = vpop.xlane.xlu0 %1938
      %v1940 = vcvt.f32.s32 %v1939
      %v1941 = vcvt.f32.s32 %v1935
      %v1942 = vshll.u32 %v1941, 16
      %v1943 = vadd.s32 %v1942, %v1940
      %vm1944 = vcmp.eq.s32.totalorder %v706, %v1943
      %v1945 = vsel %vm1944, 1, 0
      %v1946 = vcvt.s32.f32 %v1945
      %v1947 = vld [vmem:[%s5] sm:$0xff]
      %v1948 = vld [vmem:[%s5 + $0x8] sm:$0xff]
      %v1949 = vld [vmem:[%s5 + $0x10] sm:$0xff]
      %v1950 = vld [vmem:[%s5 + $0x18] sm:$0xff]
      %v1951 = vld [vmem:[%s5 + $0x20] sm:$0xff]
      %v1952 = vld [vmem:[%s5 + $0x28] sm:$0xff]
      %v1953 = vld [vmem:[%s5 + $0x30] sm:$0xff]
      %v1954 = vld [vmem:[%s5 + $0x38] sm:$0xff]
      %v1955 = vld [vmem:[%s5 + $0x40] sm:$0xff]
      %v1956 = vld [vmem:[%s5 + $0x48] sm:$0xff]
      %v1957 = vld [vmem:[%s5 + $0x50] sm:$0xff]
      %v1958 = vld [vmem:[%s5 + $0x58] sm:$0xff]
      %v1959 = vld [vmem:[%s5 + $0x60] sm:$0xff]
      %v1960 = vld [vmem:[%s5 + $0x68] sm:$0xff]
      %v1961 = vld [vmem:[%s5 + $0x70] sm:$0xff]
      %v1962 = vld [vmem:[%s5 + $0x78] sm:$0xff]
      %1963 = vmatprep.subr.mxu0 0.0
      %1964 = vmatpush1.msra.mxu0 %v1962
      %1965 = vmatprep.subr.mxu0 0.0
      %1966 = vmatpush1.msra.mxu0 %v1961
      %1967 = vmatprep.subr.mxu0 0.0
      %1968 = vmatpush1.msra.mxu0 %v1960
      %1969 = vmatprep.subr.mxu0 0.0
      %1970 = vmatpush1.msra.mxu0 %v1959
      %1971 = vmatprep.subr.mxu0 0.0
      %1972 = vmatpush1.msra.mxu0 %v1958
      %1973 = vmatprep.subr.mxu0 0.0
      %1974 = vmatpush1.msra.mxu0 %v1957
      %1975 = vmatprep.subr.mxu0 0.0
      %1976 = vmatpush1.msra.mxu0 %v1956
      %1977 = vmatprep.subr.mxu0 0.0
      %1978 = vmatpush1.msra.mxu0 %v1955
      %1979 = vmatprep.subr.mxu0 0.0
      %1980 = vmatpush1.msra.mxu0 %v1954
      %1981 = vmatprep.subr.mxu0 0.0
      %1982 = vmatpush1.msra.mxu0 %v1953
      %1983 = vmatprep.subr.mxu0 0.0
      %1984 = vmatpush1.msra.mxu0 %v1952
      %1985 = vmatprep.subr.mxu0 0.0
      %1986 = vmatpush1.msra.mxu0 %v1951
      %1987 = vmatprep.subr.mxu0 0.0
      %1988 = vmatpush1.msra.mxu0 %v1950
      %1989 = vmatprep.subr.mxu0 0.0
      %1990 = vmatpush1.msra.mxu0 %v1949
      %1991 = vmatprep.subr.mxu0 0.0
      %1992 = vmatpush1.msra.mxu0 %v1948
      %1993 = vmatprep.subr.mxu0 0.0
      %1994 = vmatpush1.msra.mxu0 %v1947
      %1995 = vmatprep.subr.mxu0 0.0
      %1996 = vmatpush2.msra.mxu0 0.0
      %1997 = vmatprep.subr.mxu0 0.0
      %1998 = vmatpush2.msra.mxu0 0.0
      %1999 = vmatprep.subr.mxu0 0.0
      %2000 = vmatpush2.msra.mxu0 0.0
      %2001 = vmatprep.subr.mxu0 0.0
      %2002 = vmatpush2.msra.mxu0 0.0
      %2003 = vmatprep.subr.mxu0 0.0
      %2004 = vmatpush2.msra.mxu0 0.0
      %2005 = vmatprep.subr.mxu0 0.0
      %2006 = vmatpush2.msra.mxu0 0.0
      %2007 = vmatprep.subr.mxu0 0.0
      %2008 = vmatpush2.msra.mxu0 0.0
      %2009 = vmatprep.subr.mxu0 0.0
      %2010 = vmatpush2.msra.mxu0 0.0
      %2011 = vmatprep.subr.mxu0 0.0
      %2012 = vmatpush2.msra.mxu0 0.0
      %2013 = vmatprep.subr.mxu0 0.0
      %2014 = vmatpush2.msra.mxu0 0.0
      %2015 = vmatprep.subr.mxu0 0.0
      %2016 = vmatpush2.msra.mxu0 0.0
      %2017 = vmatprep.subr.mxu0 0.0
      %2018 = vmatpush2.msra.mxu0 0.0
      %2019 = vmatprep.subr.mxu0 0.0
      %2020 = vmatpush2.msra.mxu0 0.0
      %2021 = vmatprep.subr.mxu0 0.0
      %2022 = vmatpush2.msra.mxu0 0.0
      %2023 = vmatprep.subr.mxu0 0.0
      %2024 = vmatpush2.msra.mxu0 0.0
      %2025 = vmatprep.subr.mxu0 0.0
      %2026 = vmatpush2.msra.mxu0 0.0
      %2027 = vmatprep.mubr.f32.mxu0 0.0
      %2028 = vmatmul.mubr.f32.gmra.mxu0 %v1946
      %v2029 = vpop.f32.mrf.mxu0
      %v2030 = vadd.f32 0.0, %v2029
      %v2031 = vpop.f32.mrf.mxu0
      %2032 = vdwg.mxu0
      %s2033 = sadd.s32 %s25, 1
      %s2034 = smul.u32 %s2033, 8
      %s2035 = scalar_lea.vmem %s0, %s2034
      %v2036 = vld [vmem:[%s2035] sm:$0xff]
      %s2037 = scalar_lea.vmem %s1, %s2034
      %v2038 = vld [vmem:[%s2037] sm:$0xff]
      %2040 = vset.pattern.permute.xlu0 0
      %2041 = vperm.xlu0 %2040, %v2036
      %v2042 = vpop.permute.xlu0 %2041
      %v2044 = vmul.f32 %v2042, %v2038
      %v2045 = vsub.f32 1.0, %v2036
      %2047 = vset.pattern.permute.xlu0 0
      %2048 = vperm.xlu0 %2047, %v2045
      %v2049 = vpop.permute.xlu0 %2048
      %v2051 = vmul.f32 %v2049, %v2030
      %v2052 = vadd.f32 %v2044, %v2051
      %2053 = vst.msk [vmem:[#allocation3] sm:$0xff] %vm1620, %v2052
      %p2054 = scmp.lt.s32.totalorder %s25, 6
      %s2055 = scalar_select %p2054, %s25, 6
      %s2056 = smul.addr %s2055, 8
      %s2057 = scalar_lea.vmem %s14, %s2056
      // Predicated region
      $region81: #{_forward.3} parent=75 // pred_check
        %p2058 = pneg %p337
      $region82: #{_forward.3} parent=75 // pred_check_branch
        %2060 = sbr.rel (%p2058) target = $region84
      $region83: #{_forward.3} parent=75 // pred_region
        _
      $region84: #{_forward.3} parent=75 // pred_fallthru
        _
    $region76: #{_forward.3} parent=5 // pred_fallthru
      _
    %p2061 = scmp.le.s32.totalorder 2, %s20
    // Predicated region
    $region85: #{_forward.3} parent=5 // pred_check
      %p2062 = pneg %p2061
    $region86: #{_forward.3} parent=5 // pred_check_branch
      %2064 = sbr.rel (%p2062) target = $region88
    $region87: #{_forward.3} parent=5 // pred_region
      %s2065 = ssub.s32 %s20, 2
      // Predicated region
      $region89: #{_forward.3} parent=87 // pred_check
        %p2066 = pneg %p343
      $region90: #{_forward.3} parent=87 // pred_check_branch
        %2068 = sbr.rel (%p2066) target = $region92
      $region91: #{_forward.3} parent=87 // pred_region
        %p2069 = scmp.lt.s32.totalorder %s26, 6
        %s2070 = scalar_select %p2069, %s26, 6
        %s2071 = smul.addr %s2070, 8
        %s2072 = scalar_lea.vmem %s14, %s2071
      $region92: #{_forward.3} parent=87 // pred_fallthru
        _
    $region88: #{_forward.3} parent=5 // pred_fallthru
      _
  $region6: #{_forward.3} parent=0 // loop_footer
    %s24 = sadd.s32 1, %s20
  $region7: #{_forward.3} parent=0 // loop_footer_branch
    %19 = sbr.rel target = $region3
  $region8: #{_forward.3} parent=0 // loop_exit
    _

</llo_original>
